<compile_context>
chip_gen: v7x
topology: tpu7x:2x2x1
jax: 0.10.0
libtpu: 0.0.40
codegen_flags: <defaults>
</compile_context>

<pallas_src>
import functools

import jax
import jax.numpy as jnp
from jax.experimental import pallas as pl
from jax.experimental.pallas import tpu as pltpu


def _round_up(n, m):
    return ((n + m - 1) // m) * m


def lstm_kernel(x2d_ref, wih0_ref, whh0_ref, b0_ref,
                wih1_ref, whh1_ref, b1_ref,
                wfc_ref, bfc_ref,
                out_ref,
                *, T, Bp, H):
    """Whole-sequence 2-layer LSTM + classifier in one invocation.

    x2d_ref: (T*Bp, D) time-major input, batch padded to Bp (multiple of 8).
    Weights pre-transposed to (in_features, 4H); gate order is i, f, g, o.
    """
    H4 = 4 * H

    # ---- Hoisted input projection for layer 0 (all T time steps at once) ----
    # One (T*Bp, D) @ (D, 4H) matmul replaces T tiny per-step matmuls and
    # takes the x @ W_ih work off the serial recurrence chain.
    xproj = (jnp.dot(x2d_ref[...], wih0_ref[...],
                     preferred_element_type=jnp.float32)
             + b0_ref[...])                                   # (T*Bp, 4H)

    # Hoist weight loads and bias broadcast out of the time loop
    # (broadcast_in_dim is not CSE'd across iterations).
    whh0 = whh0_ref[...]
    wih1 = wih1_ref[...]
    whh1 = whh1_ref[...]
    b1 = jnp.broadcast_to(b1_ref[...], (Bp, H4))

    def gates_to_hc(gates, c):
        # Full-vreg nonlinearities (4H = one lane-width chunk), then slice:
        # 2 EUP passes instead of 4 partial-lane ones.
        sig = jax.nn.sigmoid(gates)
        th = jnp.tanh(gates)
        i = sig[:, 0 * H:1 * H]
        f = sig[:, 1 * H:2 * H]
        o = sig[:, 3 * H:4 * H]
        g = th[:, 2 * H:3 * H]
        c_new = f * c + i * g
        h_new = o * jnp.tanh(c_new)
        return h_new, c_new

    # h0 = c0 = 0, as in the PyTorch forward.
    h1 = jnp.zeros((Bp, H), jnp.float32)
    c1 = jnp.zeros((Bp, H), jnp.float32)
    h2 = jnp.zeros((Bp, H), jnp.float32)
    c2 = jnp.zeros((Bp, H), jnp.float32)

    # Fully-unrolled static time loop (T is small and known at trace time);
    # all slices below are static so the LLO scheduler sees the whole chain.
    for t in range(T):
        xp_t = xproj[t * Bp:(t + 1) * Bp, :]                  # (Bp, 4H)

        # Layer 0: only the recurrent matmul is on the serial path.
        g0 = xp_t + jnp.dot(h1, whh0, preferred_element_type=jnp.float32)
        h1, c1 = gates_to_hc(g0, c1)

        # Layer 1: input is layer-0 hidden state.
        g1 = (jnp.dot(h1, wih1, preferred_element_type=jnp.float32)
              + jnp.dot(h2, whh1, preferred_element_type=jnp.float32)
              + b1)
        h2, c2 = gates_to_hc(g1, c2)

    # Final classifier on the last time step's top-layer hidden state.
    out_ref[...] = (jnp.dot(h2, wfc_ref[...],
                            preferred_element_type=jnp.float32)
                    + bfc_ref[...])


def random_number_lstm_forward(x, params):
    """x: (B, T, D) float32 (batch_first, like PyTorch). Returns (B, num_classes)."""
    B, T, D = x.shape
    H = params["whh0"].shape[0]
    C = params["wfc"].shape[1]

    # Pad batch to the f32 sublane count so vector ops / MXU rows aren't
    # mostly masked; padded rows are discarded at the end.
    Bp = max(8, _round_up(B, 8))
    x_p = jnp.pad(x, ((0, Bp - B), (0, 0), (0, 0)))
    x2d = jnp.transpose(x_p, (1, 0, 2)).reshape(T * Bp, D)    # time-major, flat

    kernel = functools.partial(lstm_kernel, T=T, Bp=Bp, H=H)

    vmem_spec = pl.BlockSpec(memory_space=pltpu.MemorySpace.VMEM)

    out_p = pl.pallas_call(
        kernel,
        out_shape=jax.ShapeDtypeStruct((Bp, C), jnp.float32),
        in_specs=[vmem_spec] * 9,          # everything fits VMEM; no grid/pipeline
        out_specs=vmem_spec,
    )(x2d, params["wih0"], params["whh0"], params["b0"],
      params["wih1"], params["whh1"], params["b1"],
      params["wfc"], params["bfc"])

    return out_p[:B]


def init_params(key, input_size, hidden_size, num_classes):
    """Deterministic init mimicking PyTorch's U(-1/sqrt(H), 1/sqrt(H))."""
    k = 1.0 / jnp.sqrt(jnp.float32(hidden_size))
    keys = jax.random.split(key, 12)
    u = lambda kk, shape: jax.random.uniform(kk, shape, jnp.float32, -k, k)
    H4 = 4 * hidden_size
    params = {
        # stored pre-transposed: (in_features, 4H)
        "wih0": u(keys[0], (input_size, H4)),
        "whh0": u(keys[1], (hidden_size, H4)),
        "b0":   (u(keys[2], (1, H4)) + u(keys[3], (1, H4))),    # b_ih + b_hh
        "wih1": u(keys[4], (hidden_size, H4)),
        "whh1": u(keys[5], (hidden_size, H4)),
        "b1":   (u(keys[6], (1, H4)) + u(keys[7], (1, H4))),
        "wfc":  u(keys[8], (hidden_size, num_classes)),
        "bfc":  u(keys[9], (1, num_classes)),
    }
    return params


def reference_forward(x, params, hidden_size):
    """Pure-JAX reference (lax.scan) for correctness checking."""
    B, T, D = x.shape

    def cell(x_t, h, c, w_ih, w_hh, b):
        gates = x_t @ w_ih + h @ w_hh + b
        i = jax.nn.sigmoid(gates[:, 0 * hidden_size:1 * hidden_size])
        f = jax.nn.sigmoid(gates[:, 1 * hidden_size:2 * hidden_size])
        g = jnp.tanh(gates[:, 2 * hidden_size:3 * hidden_size])
        o = jax.nn.sigmoid(gates[:, 3 * hidden_size:4 * hidden_size])
        c_new = f * c + i * g
        return o * jnp.tanh(c_new), c_new

    def step(carry, x_t):
        h1, c1, h2, c2 = carry
        h1, c1 = cell(x_t, h1, c1, params["wih0"], params["whh0"], params["b0"])
        h2, c2 = cell(h1, h2, c2, params["wih1"], params["whh1"], params["b1"])
        return (h1, c1, h2, c2), None

    z = jnp.zeros((B, hidden_size), jnp.float32)
    (h1, c1, h2, c2), _ = jax.lax.scan(step, (z, z, z, z),
                                       jnp.transpose(x, (1, 0, 2)))
    return h2 @ params["wfc"] + params["bfc"]


if __name__ == "__main__":
    # Small shapes consistent with the module's forward:
    #   x: (batch, seq, input_size); LSTM hidden_size=32; num_classes=16.
    batch, seq, input_size, hidden_size, num_classes = 2, 8, 8, 32, 16

    key = jax.random.PRNGKey(0)
    k_params, k_x = jax.random.split(key)
    params = init_params(k_params, input_size, hidden_size, num_classes)
    x = jax.random.normal(k_x, (batch, seq, input_size), jnp.float32)

    out = random_number_lstm_forward(x, params)
    out = jax.block_until_ready(out)

    ref = reference_forward(x, params, hidden_size)
    assert out.shape == (batch, num_classes), out.shape
    assert jnp.allclose(out, ref, rtol=1e-4, atol=1e-4), (
        float(jnp.max(jnp.abs(out - ref))))

    print("KERNEL_OK")
</pallas_src>

<mosaic_0001>
module attributes {stable_mosaic.version = 11 : i64} {
  func.func @lstm_kernel(%arg0: memref<64x8xf32, #tpu.memory_space<vmem>>, %arg1: memref<8x128xf32, #tpu.memory_space<vmem>>, %arg2: memref<32x128xf32, #tpu.memory_space<vmem>>, %arg3: memref<1x128xf32, #tpu.memory_space<vmem>>, %arg4: memref<32x128xf32, #tpu.memory_space<vmem>>, %arg5: memref<32x128xf32, #tpu.memory_space<vmem>>, %arg6: memref<1x128xf32, #tpu.memory_space<vmem>>, %arg7: memref<32x16xf32, #tpu.memory_space<vmem>>, %arg8: memref<1x16xf32, #tpu.memory_space<vmem>>, %arg9: memref<8x16xf32, #tpu.memory_space<vmem>>) attributes {dimension_semantics = [], scalar_prefetch = 0 : i64, scratch_operands = 0 : i64, tpu.core_type = #tpu.core_type<tc>} {
    %c0 = arith.constant 0 : index
    %c0_0 = arith.constant 0 : index
    %0 = vector.load %arg0[%c0, %c0_0] : memref<64x8xf32, #tpu.memory_space<vmem>>, vector<64x8xf32>
    %c0_1 = arith.constant 0 : index
    %c0_2 = arith.constant 0 : index
    %1 = vector.load %arg1[%c0_1, %c0_2] : memref<8x128xf32, #tpu.memory_space<vmem>>, vector<8x128xf32>
    %cst = arith.constant dense<0.000000e+00> : vector<64x128xf32>
    %2 = tpu.matmul %0, %1, %cst {dimension_numbers = #tpu.dot_dimension_numbers<[1], [0], [0], [1], [0, 0, 1, 1], [], []>} : vector<64x8xf32>, vector<8x128xf32>, vector<64x128xf32> -> vector<64x128xf32>
    %c0_3 = arith.constant 0 : index
    %c0_4 = arith.constant 0 : index
    %3 = vector.load %arg3[%c0_3, %c0_4] : memref<1x128xf32, #tpu.memory_space<vmem>>, vector<1x128xf32>
    %4 = vector.broadcast %3 : vector<1x128xf32> to vector<64x128xf32>
    %5 = arith.addf %2, %4 : vector<64x128xf32>
    %c0_5 = arith.constant 0 : index
    %c0_6 = arith.constant 0 : index
    %6 = vector.load %arg2[%c0_5, %c0_6] : memref<32x128xf32, #tpu.memory_space<vmem>>, vector<32x128xf32>
    %c0_7 = arith.constant 0 : index
    %c0_8 = arith.constant 0 : index
    %7 = vector.load %arg4[%c0_7, %c0_8] : memref<32x128xf32, #tpu.memory_space<vmem>>, vector<32x128xf32>
    %c0_9 = arith.constant 0 : index
    %c0_10 = arith.constant 0 : index
    %8 = vector.load %arg5[%c0_9, %c0_10] : memref<32x128xf32, #tpu.memory_space<vmem>>, vector<32x128xf32>
    %c0_11 = arith.constant 0 : index
    %c0_12 = arith.constant 0 : index
    %9 = vector.load %arg6[%c0_11, %c0_12] : memref<1x128xf32, #tpu.memory_space<vmem>>, vector<1x128xf32>
    %10 = vector.shape_cast %9 : vector<1x128xf32> to vector<1x128xf32>
    %11 = vector.broadcast %10 : vector<1x128xf32> to vector<8x128xf32>
    %cst_13 = arith.constant 0.000000e+00 : f32
    %12 = vector.broadcast %cst_13 : f32 to vector<8x32xf32>
    %cst_14 = arith.constant 0.000000e+00 : f32
    %13 = vector.broadcast %cst_14 : f32 to vector<8x32xf32>
    %cst_15 = arith.constant 0.000000e+00 : f32
    %14 = vector.broadcast %cst_15 : f32 to vector<8x32xf32>
    %cst_16 = arith.constant 0.000000e+00 : f32
    %15 = vector.broadcast %cst_16 : f32 to vector<8x32xf32>
    %16 = vector.extract_strided_slice %5 {offsets = [0, 0], sizes = [8, 128], strides = [1, 1]} : vector<64x128xf32> to vector<8x128xf32>
    %cst_17 = arith.constant dense<0.000000e+00> : vector<8x128xf32>
    %17 = tpu.matmul %12, %6, %cst_17 {dimension_numbers = #tpu.dot_dimension_numbers<[1], [0], [0], [1], [0, 0, 1, 1], [], []>} : vector<8x32xf32>, vector<32x128xf32>, vector<8x128xf32> -> vector<8x128xf32>
    %18 = arith.addf %16, %17 : vector<8x128xf32>
    %19 = arith.negf %18 : vector<8x128xf32>
    %20 = math.exp %19 : vector<8x128xf32>
    %cst_18 = arith.constant 1.000000e+00 : f32
    %21 = vector.broadcast %cst_18 : f32 to vector<8x128xf32>
    %22 = arith.addf %21, %20 : vector<8x128xf32>
    %23 = arith.divf %21, %22 : vector<8x128xf32>
    %24 = math.tanh %18 : vector<8x128xf32>
    %25 = vector.extract_strided_slice %23 {offsets = [0, 0], sizes = [8, 32], strides = [1, 1]} : vector<8x128xf32> to vector<8x32xf32>
    %26 = vector.extract_strided_slice %23 {offsets = [0, 32], sizes = [8, 32], strides = [1, 1]} : vector<8x128xf32> to vector<8x32xf32>
    %27 = vector.extract_strided_slice %23 {offsets = [0, 96], sizes = [8, 32], strides = [1, 1]} : vector<8x128xf32> to vector<8x32xf32>
    %28 = vector.extract_strided_slice %24 {offsets = [0, 64], sizes = [8, 32], strides = [1, 1]} : vector<8x128xf32> to vector<8x32xf32>
    %29 = arith.mulf %26, %13 : vector<8x32xf32>
    %30 = arith.mulf %25, %28 : vector<8x32xf32>
    %31 = arith.addf %29, %30 : vector<8x32xf32>
    %32 = math.tanh %31 : vector<8x32xf32>
    %33 = arith.mulf %27, %32 : vector<8x32xf32>
    %cst_19 = arith.constant dense<0.000000e+00> : vector<8x128xf32>
    %34 = tpu.matmul %33, %7, %cst_19 {dimension_numbers = #tpu.dot_dimension_numbers<[1], [0], [0], [1], [0, 0, 1, 1], [], []>} : vector<8x32xf32>, vector<32x128xf32>, vector<8x128xf32> -> vector<8x128xf32>
    %cst_20 = arith.constant dense<0.000000e+00> : vector<8x128xf32>
    %35 = tpu.matmul %14, %8, %cst_20 {dimension_numbers = #tpu.dot_dimension_numbers<[1], [0], [0], [1], [0, 0, 1, 1], [], []>} : vector<8x32xf32>, vector<32x128xf32>, vector<8x128xf32> -> vector<8x128xf32>
    %36 = arith.addf %34, %35 : vector<8x128xf32>
    %37 = arith.addf %36, %11 : vector<8x128xf32>
    %38 = arith.negf %37 : vector<8x128xf32>
    %39 = math.exp %38 : vector<8x128xf32>
    %cst_21 = arith.constant 1.000000e+00 : f32
    %40 = vector.broadcast %cst_21 : f32 to vector<8x128xf32>
    %41 = arith.addf %40, %39 : vector<8x128xf32>
    %42 = arith.divf %40, %41 : vector<8x128xf32>
    %43 = math.tanh %37 : vector<8x128xf32>
    %44 = vector.extract_strided_slice %42 {offsets = [0, 0], sizes = [8, 32], strides = [1, 1]} : vector<8x128xf32> to vector<8x32xf32>
    %45 = vector.extract_strided_slice %42 {offsets = [0, 32], sizes = [8, 32], strides = [1, 1]} : vector<8x128xf32> to vector<8x32xf32>
    %46 = vector.extract_strided_slice %42 {offsets = [0, 96], sizes = [8, 32], strides = [1, 1]} : vector<8x128xf32> to vector<8x32xf32>
    %47 = vector.extract_strided_slice %43 {offsets = [0, 64], sizes = [8, 32], strides = [1, 1]} : vector<8x128xf32> to vector<8x32xf32>
    %48 = arith.mulf %45, %15 : vector<8x32xf32>
    %49 = arith.mulf %44, %47 : vector<8x32xf32>
    %50 = arith.addf %48, %49 : vector<8x32xf32>
    %51 = math.tanh %50 : vector<8x32xf32>
    %52 = arith.mulf %46, %51 : vector<8x32xf32>
    %53 = vector.extract_strided_slice %5 {offsets = [8, 0], sizes = [8, 128], strides = [1, 1]} : vector<64x128xf32> to vector<8x128xf32>
    %cst_22 = arith.constant dense<0.000000e+00> : vector<8x128xf32>
    %54 = tpu.matmul %33, %6, %cst_22 {dimension_numbers = #tpu.dot_dimension_numbers<[1], [0], [0], [1], [0, 0, 1, 1], [], []>} : vector<8x32xf32>, vector<32x128xf32>, vector<8x128xf32> -> vector<8x128xf32>
    %55 = arith.addf %53, %54 : vector<8x128xf32>
    %56 = arith.negf %55 : vector<8x128xf32>
    %57 = math.exp %56 : vector<8x128xf32>
    %cst_23 = arith.constant 1.000000e+00 : f32
    %58 = vector.broadcast %cst_23 : f32 to vector<8x128xf32>
    %59 = arith.addf %58, %57 : vector<8x128xf32>
    %60 = arith.divf %58, %59 : vector<8x128xf32>
    %61 = math.tanh %55 : vector<8x128xf32>
    %62 = vector.extract_strided_slice %60 {offsets = [0, 0], sizes = [8, 32], strides = [1, 1]} : vector<8x128xf32> to vector<8x32xf32>
    %63 = vector.extract_strided_slice %60 {offsets = [0, 32], sizes = [8, 32], strides = [1, 1]} : vector<8x128xf32> to vector<8x32xf32>
    %64 = vector.extract_strided_slice %60 {offsets = [0, 96], sizes = [8, 32], strides = [1, 1]} : vector<8x128xf32> to vector<8x32xf32>
    %65 = vector.extract_strided_slice %61 {offsets = [0, 64], sizes = [8, 32], strides = [1, 1]} : vector<8x128xf32> to vector<8x32xf32>
    %66 = arith.mulf %63, %31 : vector<8x32xf32>
    %67 = arith.mulf %62, %65 : vector<8x32xf32>
    %68 = arith.addf %66, %67 : vector<8x32xf32>
    %69 = math.tanh %68 : vector<8x32xf32>
    %70 = arith.mulf %64, %69 : vector<8x32xf32>
    %cst_24 = arith.constant dense<0.000000e+00> : vector<8x128xf32>
    %71 = tpu.matmul %70, %7, %cst_24 {dimension_numbers = #tpu.dot_dimension_numbers<[1], [0], [0], [1], [0, 0, 1, 1], [], []>} : vector<8x32xf32>, vector<32x128xf32>, vector<8x128xf32> -> vector<8x128xf32>
    %cst_25 = arith.constant dense<0.000000e+00> : vector<8x128xf32>
    %72 = tpu.matmul %52, %8, %cst_25 {dimension_numbers = #tpu.dot_dimension_numbers<[1], [0], [0], [1], [0, 0, 1, 1], [], []>} : vector<8x32xf32>, vector<32x128xf32>, vector<8x128xf32> -> vector<8x128xf32>
    %73 = arith.addf %71, %72 : vector<8x128xf32>
    %74 = arith.addf %73, %11 : vector<8x128xf32>
    %75 = arith.negf %74 : vector<8x128xf32>
    %76 = math.exp %75 : vector<8x128xf32>
    %cst_26 = arith.constant 1.000000e+00 : f32
    %77 = vector.broadcast %cst_26 : f32 to vector<8x128xf32>
    %78 = arith.addf %77, %76 : vector<8x128xf32>
    %79 = arith.divf %77, %78 : vector<8x128xf32>
    %80 = math.tanh %74 : vector<8x128xf32>
    %81 = vector.extract_strided_slice %79 {offsets = [0, 0], sizes = [8, 32], strides = [1, 1]} : vector<8x128xf32> to vector<8x32xf32>
    %82 = vector.extract_strided_slice %79 {offsets = [0, 32], sizes = [8, 32], strides = [1, 1]} : vector<8x128xf32> to vector<8x32xf32>
    %83 = vector.extract_strided_slice %79 {offsets = [0, 96], sizes = [8, 32], strides = [1, 1]} : vector<8x128xf32> to vector<8x32xf32>
    %84 = vector.extract_strided_slice %80 {offsets = [0, 64], sizes = [8, 32], strides = [1, 1]} : vector<8x128xf32> to vector<8x32xf32>
    %85 = arith.mulf %82, %50 : vector<8x32xf32>
    %86 = arith.mulf %81, %84 : vector<8x32xf32>
    %87 = arith.addf %85, %86 : vector<8x32xf32>
    %88 = math.tanh %87 : vector<8x32xf32>
    %89 = arith.mulf %83, %88 : vector<8x32xf32>
    %90 = vector.extract_strided_slice %5 {offsets = [16, 0], sizes = [8, 128], strides = [1, 1]} : vector<64x128xf32> to vector<8x128xf32>
    %cst_27 = arith.constant dense<0.000000e+00> : vector<8x128xf32>
    %91 = tpu.matmul %70, %6, %cst_27 {dimension_numbers = #tpu.dot_dimension_numbers<[1], [0], [0], [1], [0, 0, 1, 1], [], []>} : vector<8x32xf32>, vector<32x128xf32>, vector<8x128xf32> -> vector<8x128xf32>
    %92 = arith.addf %90, %91 : vector<8x128xf32>
    %93 = arith.negf %92 : vector<8x128xf32>
    %94 = math.exp %93 : vector<8x128xf32>
    %cst_28 = arith.constant 1.000000e+00 : f32
    %95 = vector.broadcast %cst_28 : f32 to vector<8x128xf32>
    %96 = arith.addf %95, %94 : vector<8x128xf32>
    %97 = arith.divf %95, %96 : vector<8x128xf32>
    %98 = math.tanh %92 : vector<8x128xf32>
    %99 = vector.extract_strided_slice %97 {offsets = [0, 0], sizes = [8, 32], strides = [1, 1]} : vector<8x128xf32> to vector<8x32xf32>
    %100 = vector.extract_strided_slice %97 {offsets = [0, 32], sizes = [8, 32], strides = [1, 1]} : vector<8x128xf32> to vector<8x32xf32>
    %101 = vector.extract_strided_slice %97 {offsets = [0, 96], sizes = [8, 32], strides = [1, 1]} : vector<8x128xf32> to vector<8x32xf32>
    %102 = vector.extract_strided_slice %98 {offsets = [0, 64], sizes = [8, 32], strides = [1, 1]} : vector<8x128xf32> to vector<8x32xf32>
    %103 = arith.mulf %100, %68 : vector<8x32xf32>
    %104 = arith.mulf %99, %102 : vector<8x32xf32>
    %105 = arith.addf %103, %104 : vector<8x32xf32>
    %106 = math.tanh %105 : vector<8x32xf32>
    %107 = arith.mulf %101, %106 : vector<8x32xf32>
    %cst_29 = arith.constant dense<0.000000e+00> : vector<8x128xf32>
    %108 = tpu.matmul %107, %7, %cst_29 {dimension_numbers = #tpu.dot_dimension_numbers<[1], [0], [0], [1], [0, 0, 1, 1], [], []>} : vector<8x32xf32>, vector<32x128xf32>, vector<8x128xf32> -> vector<8x128xf32>
    %cst_30 = arith.constant dense<0.000000e+00> : vector<8x128xf32>
    %109 = tpu.matmul %89, %8, %cst_30 {dimension_numbers = #tpu.dot_dimension_numbers<[1], [0], [0], [1], [0, 0, 1, 1], [], []>} : vector<8x32xf32>, vector<32x128xf32>, vector<8x128xf32> -> vector<8x128xf32>
    %110 = arith.addf %108, %109 : vector<8x128xf32>
    %111 = arith.addf %110, %11 : vector<8x128xf32>
    %112 = arith.negf %111 : vector<8x128xf32>
    %113 = math.exp %112 : vector<8x128xf32>
    %cst_31 = arith.constant 1.000000e+00 : f32
    %114 = vector.broadcast %cst_31 : f32 to vector<8x128xf32>
    %115 = arith.addf %114, %113 : vector<8x128xf32>
    %116 = arith.divf %114, %115 : vector<8x128xf32>
    %117 = math.tanh %111 : vector<8x128xf32>
    %118 = vector.extract_strided_slice %116 {offsets = [0, 0], sizes = [8, 32], strides = [1, 1]} : vector<8x128xf32> to vector<8x32xf32>
    %119 = vector.extract_strided_slice %116 {offsets = [0, 32], sizes = [8, 32], strides = [1, 1]} : vector<8x128xf32> to vector<8x32xf32>
    %120 = vector.extract_strided_slice %116 {offsets = [0, 96], sizes = [8, 32], strides = [1, 1]} : vector<8x128xf32> to vector<8x32xf32>
    %121 = vector.extract_strided_slice %117 {offsets = [0, 64], sizes = [8, 32], strides = [1, 1]} : vector<8x128xf32> to vector<8x32xf32>
    %122 = arith.mulf %119, %87 : vector<8x32xf32>
    %123 = arith.mulf %118, %121 : vector<8x32xf32>
    %124 = arith.addf %122, %123 : vector<8x32xf32>
    %125 = math.tanh %124 : vector<8x32xf32>
    %126 = arith.mulf %120, %125 : vector<8x32xf32>
    %127 = vector.extract_strided_slice %5 {offsets = [24, 0], sizes = [8, 128], strides = [1, 1]} : vector<64x128xf32> to vector<8x128xf32>
    %cst_32 = arith.constant dense<0.000000e+00> : vector<8x128xf32>
    %128 = tpu.matmul %107, %6, %cst_32 {dimension_numbers = #tpu.dot_dimension_numbers<[1], [0], [0], [1], [0, 0, 1, 1], [], []>} : vector<8x32xf32>, vector<32x128xf32>, vector<8x128xf32> -> vector<8x128xf32>
    %129 = arith.addf %127, %128 : vector<8x128xf32>
    %130 = arith.negf %129 : vector<8x128xf32>
    %131 = math.exp %130 : vector<8x128xf32>
    %cst_33 = arith.constant 1.000000e+00 : f32
    %132 = vector.broadcast %cst_33 : f32 to vector<8x128xf32>
    %133 = arith.addf %132, %131 : vector<8x128xf32>
    %134 = arith.divf %132, %133 : vector<8x128xf32>
    %135 = math.tanh %129 : vector<8x128xf32>
    %136 = vector.extract_strided_slice %134 {offsets = [0, 0], sizes = [8, 32], strides = [1, 1]} : vector<8x128xf32> to vector<8x32xf32>
    %137 = vector.extract_strided_slice %134 {offsets = [0, 32], sizes = [8, 32], strides = [1, 1]} : vector<8x128xf32> to vector<8x32xf32>
    %138 = vector.extract_strided_slice %134 {offsets = [0, 96], sizes = [8, 32], strides = [1, 1]} : vector<8x128xf32> to vector<8x32xf32>
    %139 = vector.extract_strided_slice %135 {offsets = [0, 64], sizes = [8, 32], strides = [1, 1]} : vector<8x128xf32> to vector<8x32xf32>
    %140 = arith.mulf %137, %105 : vector<8x32xf32>
    %141 = arith.mulf %136, %139 : vector<8x32xf32>
    %142 = arith.addf %140, %141 : vector<8x32xf32>
    %143 = math.tanh %142 : vector<8x32xf32>
    %144 = arith.mulf %138, %143 : vector<8x32xf32>
    %cst_34 = arith.constant dense<0.000000e+00> : vector<8x128xf32>
    %145 = tpu.matmul %144, %7, %cst_34 {dimension_numbers = #tpu.dot_dimension_numbers<[1], [0], [0], [1], [0, 0, 1, 1], [], []>} : vector<8x32xf32>, vector<32x128xf32>, vector<8x128xf32> -> vector<8x128xf32>
    %cst_35 = arith.constant dense<0.000000e+00> : vector<8x128xf32>
    %146 = tpu.matmul %126, %8, %cst_35 {dimension_numbers = #tpu.dot_dimension_numbers<[1], [0], [0], [1], [0, 0, 1, 1], [], []>} : vector<8x32xf32>, vector<32x128xf32>, vector<8x128xf32> -> vector<8x128xf32>
    %147 = arith.addf %145, %146 : vector<8x128xf32>
    %148 = arith.addf %147, %11 : vector<8x128xf32>
    %149 = arith.negf %148 : vector<8x128xf32>
    %150 = math.exp %149 : vector<8x128xf32>
    %cst_36 = arith.constant 1.000000e+00 : f32
    %151 = vector.broadcast %cst_36 : f32 to vector<8x128xf32>
    %152 = arith.addf %151, %150 : vector<8x128xf32>
    %153 = arith.divf %151, %152 : vector<8x128xf32>
    %154 = math.tanh %148 : vector<8x128xf32>
    %155 = vector.extract_strided_slice %153 {offsets = [0, 0], sizes = [8, 32], strides = [1, 1]} : vector<8x128xf32> to vector<8x32xf32>
    %156 = vector.extract_strided_slice %153 {offsets = [0, 32], sizes = [8, 32], strides = [1, 1]} : vector<8x128xf32> to vector<8x32xf32>
    %157 = vector.extract_strided_slice %153 {offsets = [0, 96], sizes = [8, 32], strides = [1, 1]} : vector<8x128xf32> to vector<8x32xf32>
    %158 = vector.extract_strided_slice %154 {offsets = [0, 64], sizes = [8, 32], strides = [1, 1]} : vector<8x128xf32> to vector<8x32xf32>
    %159 = arith.mulf %156, %124 : vector<8x32xf32>
    %160 = arith.mulf %155, %158 : vector<8x32xf32>
    %161 = arith.addf %159, %160 : vector<8x32xf32>
    %162 = math.tanh %161 : vector<8x32xf32>
    %163 = arith.mulf %157, %162 : vector<8x32xf32>
    %164 = vector.extract_strided_slice %5 {offsets = [32, 0], sizes = [8, 128], strides = [1, 1]} : vector<64x128xf32> to vector<8x128xf32>
    %cst_37 = arith.constant dense<0.000000e+00> : vector<8x128xf32>
    %165 = tpu.matmul %144, %6, %cst_37 {dimension_numbers = #tpu.dot_dimension_numbers<[1], [0], [0], [1], [0, 0, 1, 1], [], []>} : vector<8x32xf32>, vector<32x128xf32>, vector<8x128xf32> -> vector<8x128xf32>
    %166 = arith.addf %164, %165 : vector<8x128xf32>
    %167 = arith.negf %166 : vector<8x128xf32>
    %168 = math.exp %167 : vector<8x128xf32>
    %cst_38 = arith.constant 1.000000e+00 : f32
    %169 = vector.broadcast %cst_38 : f32 to vector<8x128xf32>
    %170 = arith.addf %169, %168 : vector<8x128xf32>
    %171 = arith.divf %169, %170 : vector<8x128xf32>
    %172 = math.tanh %166 : vector<8x128xf32>
    %173 = vector.extract_strided_slice %171 {offsets = [0, 0], sizes = [8, 32], strides = [1, 1]} : vector<8x128xf32> to vector<8x32xf32>
    %174 = vector.extract_strided_slice %171 {offsets = [0, 32], sizes = [8, 32], strides = [1, 1]} : vector<8x128xf32> to vector<8x32xf32>
    %175 = vector.extract_strided_slice %171 {offsets = [0, 96], sizes = [8, 32], strides = [1, 1]} : vector<8x128xf32> to vector<8x32xf32>
    %176 = vector.extract_strided_slice %172 {offsets = [0, 64], sizes = [8, 32], strides = [1, 1]} : vector<8x128xf32> to vector<8x32xf32>
    %177 = arith.mulf %174, %142 : vector<8x32xf32>
    %178 = arith.mulf %173, %176 : vector<8x32xf32>
    %179 = arith.addf %177, %178 : vector<8x32xf32>
    %180 = math.tanh %179 : vector<8x32xf32>
    %181 = arith.mulf %175, %180 : vector<8x32xf32>
    %cst_39 = arith.constant dense<0.000000e+00> : vector<8x128xf32>
    %182 = tpu.matmul %181, %7, %cst_39 {dimension_numbers = #tpu.dot_dimension_numbers<[1], [0], [0], [1], [0, 0, 1, 1], [], []>} : vector<8x32xf32>, vector<32x128xf32>, vector<8x128xf32> -> vector<8x128xf32>
    %cst_40 = arith.constant dense<0.000000e+00> : vector<8x128xf32>
    %183 = tpu.matmul %163, %8, %cst_40 {dimension_numbers = #tpu.dot_dimension_numbers<[1], [0], [0], [1], [0, 0, 1, 1], [], []>} : vector<8x32xf32>, vector<32x128xf32>, vector<8x128xf32> -> vector<8x128xf32>
    %184 = arith.addf %182, %183 : vector<8x128xf32>
    %185 = arith.addf %184, %11 : vector<8x128xf32>
    %186 = arith.negf %185 : vector<8x128xf32>
    %187 = math.exp %186 : vector<8x128xf32>
    %cst_41 = arith.constant 1.000000e+00 : f32
    %188 = vector.broadcast %cst_41 : f32 to vector<8x128xf32>
    %189 = arith.addf %188, %187 : vector<8x128xf32>
    %190 = arith.divf %188, %189 : vector<8x128xf32>
    %191 = math.tanh %185 : vector<8x128xf32>
    %192 = vector.extract_strided_slice %190 {offsets = [0, 0], sizes = [8, 32], strides = [1, 1]} : vector<8x128xf32> to vector<8x32xf32>
    %193 = vector.extract_strided_slice %190 {offsets = [0, 32], sizes = [8, 32], strides = [1, 1]} : vector<8x128xf32> to vector<8x32xf32>
    %194 = vector.extract_strided_slice %190 {offsets = [0, 96], sizes = [8, 32], strides = [1, 1]} : vector<8x128xf32> to vector<8x32xf32>
    %195 = vector.extract_strided_slice %191 {offsets = [0, 64], sizes = [8, 32], strides = [1, 1]} : vector<8x128xf32> to vector<8x32xf32>
    %196 = arith.mulf %193, %161 : vector<8x32xf32>
    %197 = arith.mulf %192, %195 : vector<8x32xf32>
    %198 = arith.addf %196, %197 : vector<8x32xf32>
    %199 = math.tanh %198 : vector<8x32xf32>
    %200 = arith.mulf %194, %199 : vector<8x32xf32>
    %201 = vector.extract_strided_slice %5 {offsets = [40, 0], sizes = [8, 128], strides = [1, 1]} : vector<64x128xf32> to vector<8x128xf32>
    %cst_42 = arith.constant dense<0.000000e+00> : vector<8x128xf32>
    %202 = tpu.matmul %181, %6, %cst_42 {dimension_numbers = #tpu.dot_dimension_numbers<[1], [0], [0], [1], [0, 0, 1, 1], [], []>} : vector<8x32xf32>, vector<32x128xf32>, vector<8x128xf32> -> vector<8x128xf32>
    %203 = arith.addf %201, %202 : vector<8x128xf32>
    %204 = arith.negf %203 : vector<8x128xf32>
    %205 = math.exp %204 : vector<8x128xf32>
    %cst_43 = arith.constant 1.000000e+00 : f32
    %206 = vector.broadcast %cst_43 : f32 to vector<8x128xf32>
    %207 = arith.addf %206, %205 : vector<8x128xf32>
    %208 = arith.divf %206, %207 : vector<8x128xf32>
    %209 = math.tanh %203 : vector<8x128xf32>
    %210 = vector.extract_strided_slice %208 {offsets = [0, 0], sizes = [8, 32], strides = [1, 1]} : vector<8x128xf32> to vector<8x32xf32>
    %211 = vector.extract_strided_slice %208 {offsets = [0, 32], sizes = [8, 32], strides = [1, 1]} : vector<8x128xf32> to vector<8x32xf32>
    %212 = vector.extract_strided_slice %208 {offsets = [0, 96], sizes = [8, 32], strides = [1, 1]} : vector<8x128xf32> to vector<8x32xf32>
    %213 = vector.extract_strided_slice %209 {offsets = [0, 64], sizes = [8, 32], strides = [1, 1]} : vector<8x128xf32> to vector<8x32xf32>
    %214 = arith.mulf %211, %179 : vector<8x32xf32>
    %215 = arith.mulf %210, %213 : vector<8x32xf32>
    %216 = arith.addf %214, %215 : vector<8x32xf32>
    %217 = math.tanh %216 : vector<8x32xf32>
    %218 = arith.mulf %212, %217 : vector<8x32xf32>
    %cst_44 = arith.constant dense<0.000000e+00> : vector<8x128xf32>
    %219 = tpu.matmul %218, %7, %cst_44 {dimension_numbers = #tpu.dot_dimension_numbers<[1], [0], [0], [1], [0, 0, 1, 1], [], []>} : vector<8x32xf32>, vector<32x128xf32>, vector<8x128xf32> -> vector<8x128xf32>
    %cst_45 = arith.constant dense<0.000000e+00> : vector<8x128xf32>
    %220 = tpu.matmul %200, %8, %cst_45 {dimension_numbers = #tpu.dot_dimension_numbers<[1], [0], [0], [1], [0, 0, 1, 1], [], []>} : vector<8x32xf32>, vector<32x128xf32>, vector<8x128xf32> -> vector<8x128xf32>
    %221 = arith.addf %219, %220 : vector<8x128xf32>
    %222 = arith.addf %221, %11 : vector<8x128xf32>
    %223 = arith.negf %222 : vector<8x128xf32>
    %224 = math.exp %223 : vector<8x128xf32>
    %cst_46 = arith.constant 1.000000e+00 : f32
    %225 = vector.broadcast %cst_46 : f32 to vector<8x128xf32>
    %226 = arith.addf %225, %224 : vector<8x128xf32>
    %227 = arith.divf %225, %226 : vector<8x128xf32>
    %228 = math.tanh %222 : vector<8x128xf32>
    %229 = vector.extract_strided_slice %227 {offsets = [0, 0], sizes = [8, 32], strides = [1, 1]} : vector<8x128xf32> to vector<8x32xf32>
    %230 = vector.extract_strided_slice %227 {offsets = [0, 32], sizes = [8, 32], strides = [1, 1]} : vector<8x128xf32> to vector<8x32xf32>
    %231 = vector.extract_strided_slice %227 {offsets = [0, 96], sizes = [8, 32], strides = [1, 1]} : vector<8x128xf32> to vector<8x32xf32>
    %232 = vector.extract_strided_slice %228 {offsets = [0, 64], sizes = [8, 32], strides = [1, 1]} : vector<8x128xf32> to vector<8x32xf32>
    %233 = arith.mulf %230, %198 : vector<8x32xf32>
    %234 = arith.mulf %229, %232 : vector<8x32xf32>
    %235 = arith.addf %233, %234 : vector<8x32xf32>
    %236 = math.tanh %235 : vector<8x32xf32>
    %237 = arith.mulf %231, %236 : vector<8x32xf32>
    %238 = vector.extract_strided_slice %5 {offsets = [48, 0], sizes = [8, 128], strides = [1, 1]} : vector<64x128xf32> to vector<8x128xf32>
    %cst_47 = arith.constant dense<0.000000e+00> : vector<8x128xf32>
    %239 = tpu.matmul %218, %6, %cst_47 {dimension_numbers = #tpu.dot_dimension_numbers<[1], [0], [0], [1], [0, 0, 1, 1], [], []>} : vector<8x32xf32>, vector<32x128xf32>, vector<8x128xf32> -> vector<8x128xf32>
    %240 = arith.addf %238, %239 : vector<8x128xf32>
    %241 = arith.negf %240 : vector<8x128xf32>
    %242 = math.exp %241 : vector<8x128xf32>
    %cst_48 = arith.constant 1.000000e+00 : f32
    %243 = vector.broadcast %cst_48 : f32 to vector<8x128xf32>
    %244 = arith.addf %243, %242 : vector<8x128xf32>
    %245 = arith.divf %243, %244 : vector<8x128xf32>
    %246 = math.tanh %240 : vector<8x128xf32>
    %247 = vector.extract_strided_slice %245 {offsets = [0, 0], sizes = [8, 32], strides = [1, 1]} : vector<8x128xf32> to vector<8x32xf32>
    %248 = vector.extract_strided_slice %245 {offsets = [0, 32], sizes = [8, 32], strides = [1, 1]} : vector<8x128xf32> to vector<8x32xf32>
    %249 = vector.extract_strided_slice %245 {offsets = [0, 96], sizes = [8, 32], strides = [1, 1]} : vector<8x128xf32> to vector<8x32xf32>
    %250 = vector.extract_strided_slice %246 {offsets = [0, 64], sizes = [8, 32], strides = [1, 1]} : vector<8x128xf32> to vector<8x32xf32>
    %251 = arith.mulf %248, %216 : vector<8x32xf32>
    %252 = arith.mulf %247, %250 : vector<8x32xf32>
    %253 = arith.addf %251, %252 : vector<8x32xf32>
    %254 = math.tanh %253 : vector<8x32xf32>
    %255 = arith.mulf %249, %254 : vector<8x32xf32>
    %cst_49 = arith.constant dense<0.000000e+00> : vector<8x128xf32>
    %256 = tpu.matmul %255, %7, %cst_49 {dimension_numbers = #tpu.dot_dimension_numbers<[1], [0], [0], [1], [0, 0, 1, 1], [], []>} : vector<8x32xf32>, vector<32x128xf32>, vector<8x128xf32> -> vector<8x128xf32>
    %cst_50 = arith.constant dense<0.000000e+00> : vector<8x128xf32>
    %257 = tpu.matmul %237, %8, %cst_50 {dimension_numbers = #tpu.dot_dimension_numbers<[1], [0], [0], [1], [0, 0, 1, 1], [], []>} : vector<8x32xf32>, vector<32x128xf32>, vector<8x128xf32> -> vector<8x128xf32>
    %258 = arith.addf %256, %257 : vector<8x128xf32>
    %259 = arith.addf %258, %11 : vector<8x128xf32>
    %260 = arith.negf %259 : vector<8x128xf32>
    %261 = math.exp %260 : vector<8x128xf32>
    %cst_51 = arith.constant 1.000000e+00 : f32
    %262 = vector.broadcast %cst_51 : f32 to vector<8x128xf32>
    %263 = arith.addf %262, %261 : vector<8x128xf32>
    %264 = arith.divf %262, %263 : vector<8x128xf32>
    %265 = math.tanh %259 : vector<8x128xf32>
    %266 = vector.extract_strided_slice %264 {offsets = [0, 0], sizes = [8, 32], strides = [1, 1]} : vector<8x128xf32> to vector<8x32xf32>
    %267 = vector.extract_strided_slice %264 {offsets = [0, 32], sizes = [8, 32], strides = [1, 1]} : vector<8x128xf32> to vector<8x32xf32>
    %268 = vector.extract_strided_slice %264 {offsets = [0, 96], sizes = [8, 32], strides = [1, 1]} : vector<8x128xf32> to vector<8x32xf32>
    %269 = vector.extract_strided_slice %265 {offsets = [0, 64], sizes = [8, 32], strides = [1, 1]} : vector<8x128xf32> to vector<8x32xf32>
    %270 = arith.mulf %267, %235 : vector<8x32xf32>
    %271 = arith.mulf %266, %269 : vector<8x32xf32>
    %272 = arith.addf %270, %271 : vector<8x32xf32>
    %273 = math.tanh %272 : vector<8x32xf32>
    %274 = arith.mulf %268, %273 : vector<8x32xf32>
    %275 = vector.extract_strided_slice %5 {offsets = [56, 0], sizes = [8, 128], strides = [1, 1]} : vector<64x128xf32> to vector<8x128xf32>
    %cst_52 = arith.constant dense<0.000000e+00> : vector<8x128xf32>
    %276 = tpu.matmul %255, %6, %cst_52 {dimension_numbers = #tpu.dot_dimension_numbers<[1], [0], [0], [1], [0, 0, 1, 1], [], []>} : vector<8x32xf32>, vector<32x128xf32>, vector<8x128xf32> -> vector<8x128xf32>
    %277 = arith.addf %275, %276 : vector<8x128xf32>
    %278 = arith.negf %277 : vector<8x128xf32>
    %279 = math.exp %278 : vector<8x128xf32>
    %cst_53 = arith.constant 1.000000e+00 : f32
    %280 = vector.broadcast %cst_53 : f32 to vector<8x128xf32>
    %281 = arith.addf %280, %279 : vector<8x128xf32>
    %282 = arith.divf %280, %281 : vector<8x128xf32>
    %283 = math.tanh %277 : vector<8x128xf32>
    %284 = vector.extract_strided_slice %282 {offsets = [0, 0], sizes = [8, 32], strides = [1, 1]} : vector<8x128xf32> to vector<8x32xf32>
    %285 = vector.extract_strided_slice %282 {offsets = [0, 32], sizes = [8, 32], strides = [1, 1]} : vector<8x128xf32> to vector<8x32xf32>
    %286 = vector.extract_strided_slice %282 {offsets = [0, 96], sizes = [8, 32], strides = [1, 1]} : vector<8x128xf32> to vector<8x32xf32>
    %287 = vector.extract_strided_slice %283 {offsets = [0, 64], sizes = [8, 32], strides = [1, 1]} : vector<8x128xf32> to vector<8x32xf32>
    %288 = arith.mulf %285, %253 : vector<8x32xf32>
    %289 = arith.mulf %284, %287 : vector<8x32xf32>
    %290 = arith.addf %288, %289 : vector<8x32xf32>
    %291 = math.tanh %290 : vector<8x32xf32>
    %292 = arith.mulf %286, %291 : vector<8x32xf32>
    %cst_54 = arith.constant dense<0.000000e+00> : vector<8x128xf32>
    %293 = tpu.matmul %292, %7, %cst_54 {dimension_numbers = #tpu.dot_dimension_numbers<[1], [0], [0], [1], [0, 0, 1, 1], [], []>} : vector<8x32xf32>, vector<32x128xf32>, vector<8x128xf32> -> vector<8x128xf32>
    %cst_55 = arith.constant dense<0.000000e+00> : vector<8x128xf32>
    %294 = tpu.matmul %274, %8, %cst_55 {dimension_numbers = #tpu.dot_dimension_numbers<[1], [0], [0], [1], [0, 0, 1, 1], [], []>} : vector<8x32xf32>, vector<32x128xf32>, vector<8x128xf32> -> vector<8x128xf32>
    %295 = arith.addf %293, %294 : vector<8x128xf32>
    %296 = arith.addf %295, %11 : vector<8x128xf32>
    %297 = arith.negf %296 : vector<8x128xf32>
    %298 = math.exp %297 : vector<8x128xf32>
    %cst_56 = arith.constant 1.000000e+00 : f32
    %299 = vector.broadcast %cst_56 : f32 to vector<8x128xf32>
    %300 = arith.addf %299, %298 : vector<8x128xf32>
    %301 = arith.divf %299, %300 : vector<8x128xf32>
    %302 = math.tanh %296 : vector<8x128xf32>
    %303 = vector.extract_strided_slice %301 {offsets = [0, 0], sizes = [8, 32], strides = [1, 1]} : vector<8x128xf32> to vector<8x32xf32>
    %304 = vector.extract_strided_slice %301 {offsets = [0, 32], sizes = [8, 32], strides = [1, 1]} : vector<8x128xf32> to vector<8x32xf32>
    %305 = vector.extract_strided_slice %301 {offsets = [0, 96], sizes = [8, 32], strides = [1, 1]} : vector<8x128xf32> to vector<8x32xf32>
    %306 = vector.extract_strided_slice %302 {offsets = [0, 64], sizes = [8, 32], strides = [1, 1]} : vector<8x128xf32> to vector<8x32xf32>
    %307 = arith.mulf %304, %272 : vector<8x32xf32>
    %308 = arith.mulf %303, %306 : vector<8x32xf32>
    %309 = arith.addf %307, %308 : vector<8x32xf32>
    %310 = math.tanh %309 : vector<8x32xf32>
    %311 = arith.mulf %305, %310 : vector<8x32xf32>
    %c0_57 = arith.constant 0 : index
    %c0_58 = arith.constant 0 : index
    %312 = vector.load %arg7[%c0_57, %c0_58] : memref<32x16xf32, #tpu.memory_space<vmem>>, vector<32x16xf32>
    %cst_59 = arith.constant dense<0.000000e+00> : vector<8x16xf32>
    %313 = tpu.matmul %311, %312, %cst_59 {dimension_numbers = #tpu.dot_dimension_numbers<[1], [0], [0], [1], [0, 0, 1, 1], [], []>} : vector<8x32xf32>, vector<32x16xf32>, vector<8x16xf32> -> vector<8x16xf32>
    %c0_60 = arith.constant 0 : index
    %c0_61 = arith.constant 0 : index
    %314 = vector.load %arg8[%c0_60, %c0_61] : memref<1x16xf32, #tpu.memory_space<vmem>>, vector<1x16xf32>
    %315 = vector.broadcast %314 : vector<1x16xf32> to vector<8x16xf32>
    %316 = arith.addf %313, %315 : vector<8x16xf32>
    %c0_62 = arith.constant 0 : index
    %c0_63 = arith.constant 0 : index
    %317 = vector.load %arg9[%c0_62, %c0_63] : memref<8x16xf32, #tpu.memory_space<vmem>>, vector<8x16xf32>
    tpu.vector_store %arg9[%c0_62, %c0_63], %316 {strides = array<i32>} : memref<8x16xf32, #tpu.memory_space<vmem>>, vector<8x16xf32>,
    return
  }
}

</mosaic_0001>

<llo_original>
// kernel: tpu_custom_call.1
$region0: #{tpu_custom_call.1}
  #allocation0 [shape = 'u32[]', space=smem, size = 0x4, offset = 0x4, fixed_abs, tag = 'smem constant byte address 0x4 - core index']
  #allocation1 [shape = 'u32[144,128]{1,0:T(1,128)}', space=vmem, size = 0x12000, scoped, tag = 'internal scratch']
  %s0 = inlined_call_operand.vmem [shape: f32[64,8], index: 0, kind: input, shape index: {}]
  %s1 = inlined_call_operand.vmem [shape: f32[8,128], index: 1, kind: input, shape index: {}]
  %s2 = inlined_call_operand.vmem [shape: f32[32,128], index: 2, kind: input, shape index: {}]
  %s3 = inlined_call_operand.vmem [shape: f32[1,128], index: 3, kind: input, shape index: {}]
  %s4 = inlined_call_operand.vmem [shape: f32[32,128], index: 4, kind: input, shape index: {}]
  %s5 = inlined_call_operand.vmem [shape: f32[32,128], index: 5, kind: input, shape index: {}]
  %s6 = inlined_call_operand.vmem [shape: f32[1,128], index: 6, kind: input, shape index: {}]
  %s7 = inlined_call_operand.vmem [shape: f32[32,16], index: 7, kind: input, shape index: {}]
  %s8 = inlined_call_operand.vmem [shape: f32[1,16], index: 8, kind: input, shape index: {}]
  %s9 = inlined_call_operand.hbm [shape: f32[8,16], index: 9, kind: output, shape index: {}]
  %s10 = sld [smem:[#allocation0]]
  $region46: #{tpu_custom_call.1} parent=0
    _
  %s12 = ssub.s32 1, %s10
  %s13 = scalar_select 0, %s12, %s10
  $region1: #{tpu_custom_call.1} parent=0
    #allocation2 [shape = 'u8[4096]{0}', space=vmem, size = 0x1000, scoped, tag = 'output window, operand 0, single buffered']
    #allocation3 [shape = 's32[1]{0}', space=sflag, size = 0x4, scoped, tag = 'scoped memory for tpu_custom_call.1']
    %14 = vsyncpa [#allocation3], 0
    // Predicated region
    $region2: #{tpu_custom_call.1} parent=1 // pred_check
      _
    $region3: #{tpu_custom_call.1} parent=1 // pred_check_branch
      %16 = sbr.rel (0) target = $region5
    $region4: #{tpu_custom_call.1} parent=1 // pred_region
      _
    $region5: #{tpu_custom_call.1} parent=1 // pred_fallthru
      _
    // Predicated region
    $region6: #{tpu_custom_call.1} parent=1 // pred_check
      _
    $region7: #{tpu_custom_call.1} parent=1 // pred_check_branch
      %18 = sbr.rel (0) target = $region9
    $region8: #{tpu_custom_call.1} parent=1 // pred_region
      _
    $region9: #{tpu_custom_call.1} parent=1 // pred_fallthru
      _
    // Predicated region
    $region10: #{tpu_custom_call.1} parent=1 // pred_check
      _
    $region11: #{tpu_custom_call.1} parent=1 // pred_check_branch
      %20 = sbr.rel (0) target = $region13
    $region12: #{tpu_custom_call.1} parent=1 // pred_region
      _
    $region13: #{tpu_custom_call.1} parent=1 // pred_fallthru
      _
    // Predicated region
    $region14: #{tpu_custom_call.1} parent=1 // pred_check
      _
    $region15: #{tpu_custom_call.1} parent=1 // pred_check_branch
      %22 = sbr.rel (0) target = $region17
    $region16: #{tpu_custom_call.1} parent=1 // pred_region
      _
    $region17: #{tpu_custom_call.1} parent=1 // pred_fallthru
      _
    // Predicated region
    $region18: #{tpu_custom_call.1} parent=1 // pred_check
      _
    $region19: #{tpu_custom_call.1} parent=1 // pred_check_branch
      %24 = sbr.rel (0) target = $region21
    $region20: #{tpu_custom_call.1} parent=1 // pred_region
      _
    $region21: #{tpu_custom_call.1} parent=1 // pred_fallthru
      _
    // Predicated region
    $region22: #{tpu_custom_call.1} parent=1 // pred_check
      _
    $region23: #{tpu_custom_call.1} parent=1 // pred_check_branch
      %26 = sbr.rel (0) target = $region25
    $region24: #{tpu_custom_call.1} parent=1 // pred_region
      _
    $region25: #{tpu_custom_call.1} parent=1 // pred_fallthru
      _
    // Predicated region
    $region26: #{tpu_custom_call.1} parent=1 // pred_check
      _
    $region27: #{tpu_custom_call.1} parent=1 // pred_check_branch
      %28 = sbr.rel (0) target = $region29
    $region28: #{tpu_custom_call.1} parent=1 // pred_region
      _
    $region29: #{tpu_custom_call.1} parent=1 // pred_fallthru
      _
    // Predicated region
    $region30: #{tpu_custom_call.1} parent=1 // pred_check
      _
    $region31: #{tpu_custom_call.1} parent=1 // pred_check_branch
      %30 = sbr.rel (0) target = $region33
    $region32: #{tpu_custom_call.1} parent=1 // pred_region
      _
    $region33: #{tpu_custom_call.1} parent=1 // pred_fallthru
      _
    // Predicated region
    $region34: #{tpu_custom_call.1} parent=1 // pred_check
      _
    $region35: #{tpu_custom_call.1} parent=1 // pred_check_branch
      %32 = sbr.rel (0) target = $region37
    $region36: #{tpu_custom_call.1} parent=1 // pred_region
      _
    $region37: #{tpu_custom_call.1} parent=1 // pred_fallthru
      _
    %v33 = vld [vmem:[%s0] sm:$0xff]
    %v34 = vld [vmem:[%s0 + $0x8] sm:$0xff]
    %v35 = vld [vmem:[%s0 + $0x10] sm:$0xff]
    %v36 = vld [vmem:[%s0 + $0x18] sm:$0xff]
    %v37 = vld [vmem:[%s0 + $0x20] sm:$0xff]
    %v38 = vld [vmem:[%s0 + $0x28] sm:$0xff]
    %v39 = vld [vmem:[%s0 + $0x30] sm:$0xff]
    %v40 = vld [vmem:[%s0 + $0x38] sm:$0xff]
    %v41 = vld [vmem:[%s1] sm:$0xff]
    %v42 = vld [vmem:[%s3] sm:$0x1]
    %v44 = vlaneseq
    %v45 = vshrl.u32 %v44, 7
    %v46 = vsub.s32 0, %v45
    %v47 = vrot.slane %v42, %v46
    %vm49 = vcmask 64512
    %v51 = vsel %vm49, %v33, 0
    %v54 = vsel %vm49, %v34, 0
    %v57 = vsel %vm49, %v35, 0
    %v60 = vsel %vm49, %v36, 0
    %v63 = vsel %vm49, %v37, 0
    %v66 = vsel %vm49, %v38, 0
    %v69 = vsel %vm49, %v39, 0
    %v72 = vsel %vm49, %v40, 0
    %74 = vmatprep.subr.mxu0 0.0
    %75 = vmatpush1.msra.mxu0 %v41
    %76 = vmatprep.subr.mxu0 0.0
    %77 = vmatpush1.msra.mxu0 0.0
    %78 = vmatprep.subr.mxu0 0.0
    %79 = vmatpush1.msra.mxu0 0.0
    %80 = vmatprep.subr.mxu0 0.0
    %81 = vmatpush1.msra.mxu0 0.0
    %82 = vmatprep.subr.mxu0 0.0
    %83 = vmatpush1.msra.mxu0 0.0
    %84 = vmatprep.subr.mxu0 0.0
    %85 = vmatpush1.msra.mxu0 0.0
    %86 = vmatprep.subr.mxu0 0.0
    %87 = vmatpush1.msra.mxu0 0.0
    %88 = vmatprep.subr.mxu0 0.0
    %89 = vmatpush1.msra.mxu0 0.0
    %90 = vmatprep.subr.mxu0 0.0
    %91 = vmatpush1.msra.mxu0 0.0
    %92 = vmatprep.subr.mxu0 0.0
    %93 = vmatpush1.msra.mxu0 0.0
    %94 = vmatprep.subr.mxu0 0.0
    %95 = vmatpush1.msra.mxu0 0.0
    %96 = vmatprep.subr.mxu0 0.0
    %97 = vmatpush1.msra.mxu0 0.0
    %98 = vmatprep.subr.mxu0 0.0
    %99 = vmatpush1.msra.mxu0 0.0
    %100 = vmatprep.subr.mxu0 0.0
    %101 = vmatpush1.msra.mxu0 0.0
    %102 = vmatprep.subr.mxu0 0.0
    %103 = vmatpush1.msra.mxu0 0.0
    %104 = vmatprep.subr.mxu0 0.0
    %105 = vmatpush1.msra.mxu0 0.0
    %106 = vmatprep.subr.mxu0 0.0
    %107 = vmatpush1.msra.mxu0 0.0
    %108 = vmatprep.subr.mxu0 0.0
    %109 = vmatpush1.msra.mxu0 0.0
    %110 = vmatprep.subr.mxu0 0.0
    %111 = vmatpush1.msra.mxu0 0.0
    %112 = vmatprep.subr.mxu0 0.0
    %113 = vmatpush1.msra.mxu0 0.0
    %114 = vmatprep.subr.mxu0 0.0
    %115 = vmatpush1.msra.mxu0 0.0
    %116 = vmatprep.subr.mxu0 0.0
    %117 = vmatpush1.msra.mxu0 0.0
    %118 = vmatprep.subr.mxu0 0.0
    %119 = vmatpush1.msra.mxu0 0.0
    %120 = vmatprep.subr.mxu0 0.0
    %121 = vmatpush1.msra.mxu0 0.0
    %122 = vmatprep.subr.mxu0 0.0
    %123 = vmatpush1.msra.mxu0 0.0
    %124 = vmatprep.subr.mxu0 0.0
    %125 = vmatpush1.msra.mxu0 0.0
    %126 = vmatprep.subr.mxu0 0.0
    %127 = vmatpush1.msra.mxu0 0.0
    %128 = vmatprep.subr.mxu0 0.0
    %129 = vmatpush1.msra.mxu0 0.0
    %130 = vmatprep.subr.mxu0 0.0
    %131 = vmatpush1.msra.mxu0 0.0
    %132 = vmatprep.subr.mxu0 0.0
    %133 = vmatpush1.msra.mxu0 0.0
    %134 = vmatprep.subr.mxu0 0.0
    %135 = vmatpush1.msra.mxu0 0.0
    %136 = vmatprep.subr.mxu0 0.0
    %137 = vmatpush1.msra.mxu0 0.0
    %138 = vmatprep.mubr.f32.mxu0 0.0
    %139 = vmatmul.mubr.f32.gmra.mrb[0].mxu0 %v51
    %v140 = vpop.f32.mrb[0].mxu0
    %v141 = vadd.f32 %v47, %v140
    %v142 = vpop.f32.mrb[0].mxu0
    %143 = vmatprep.mubr.f32.mxu0 0.0
    %144 = vmatmul.mubr.f32.gmra.mrb[0].mxu0 %v54
    %v145 = vpop.f32.mrb[0].mxu0
    %v146 = vadd.f32 %v47, %v145
    %v147 = vpop.f32.mrb[0].mxu0
    %148 = vmatprep.mubr.f32.mxu0 0.0
    %149 = vmatmul.mubr.f32.gmra.mrb[0].mxu0 %v57
    %v150 = vpop.f32.mrb[0].mxu0
    %v151 = vadd.f32 %v47, %v150
    %v152 = vpop.f32.mrb[0].mxu0
    %153 = vmatprep.mubr.f32.mxu0 0.0
    %154 = vmatmul.mubr.f32.gmra.mrb[0].mxu0 %v60
    %v155 = vpop.f32.mrb[0].mxu0
    %v156 = vadd.f32 %v47, %v155
    %v157 = vpop.f32.mrb[0].mxu0
    %158 = vmatprep.mubr.f32.mxu0 0.0
    %159 = vmatmul.mubr.f32.gmra.mrb[0].mxu0 %v63
    %v160 = vpop.f32.mrb[0].mxu0
    %v161 = vadd.f32 %v47, %v160
    %v162 = vpop.f32.mrb[0].mxu0
    %163 = vmatprep.mubr.f32.mxu0 0.0
    %164 = vmatmul.mubr.f32.gmra.mrb[0].mxu0 %v66
    %v165 = vpop.f32.mrb[0].mxu0
    %v166 = vadd.f32 %v47, %v165
    %v167 = vpop.f32.mrb[0].mxu0
    %168 = vmatprep.mubr.f32.mxu0 0.0
    %169 = vmatmul.mubr.f32.gmra.mrb[0].mxu0 %v69
    %v170 = vpop.f32.mrb[0].mxu0
    %v171 = vadd.f32 %v47, %v170
    %v172 = vpop.f32.mrb[0].mxu0
    %173 = vmatprep.mubr.f32.mxu0 0.0
    %174 = vmatmul.mubr.f32.gmra.mrb[0].mxu0 %v72
    %v175 = vpop.f32.mrb[0].mxu0
    %v176 = vadd.f32 %v47, %v175
    %v177 = vpop.f32.mrb[0].mxu0
    %178 = vdwg.mxu0
    %v179 = vld [vmem:[%s2] sm:$0xff]
    %v180 = vld [vmem:[%s2 + $0x8] sm:$0xff]
    %v181 = vld [vmem:[%s2 + $0x10] sm:$0xff]
    %v182 = vld [vmem:[%s2 + $0x18] sm:$0xff]
    %v183 = vld [vmem:[%s4] sm:$0xff]
    %v184 = vld [vmem:[%s4 + $0x8] sm:$0xff]
    %v185 = vld [vmem:[%s4 + $0x10] sm:$0xff]
    %v186 = vld [vmem:[%s4 + $0x18] sm:$0xff]
    %v187 = vld [vmem:[%s5] sm:$0xff]
    %v188 = vld [vmem:[%s5 + $0x8] sm:$0xff]
    %v189 = vld [vmem:[%s5 + $0x10] sm:$0xff]
    %v190 = vld [vmem:[%s5 + $0x18] sm:$0xff]
    %v191 = vld [vmem:[%s6] sm:$0x1]
    %v193 = vlaneseq
    %v194 = vshrl.u32 %v193, 7
    %v195 = vsub.s32 0, %v194
    %v196 = vrot.slane %v191, %v195
    %vm198 = vcmask 261120
    %v200 = vsel %vm198, 0.0, 0
    %202 = vmatprep.subr.mxu0 0.0
    %203 = vmatpush1.msra.mxu0 %v179
    %204 = vmatprep.subr.mxu0 0.0
    %205 = vmatpush1.msra.mxu0 %v180
    %206 = vmatprep.subr.mxu0 0.0
    %207 = vmatpush1.msra.mxu0 %v181
    %208 = vmatprep.subr.mxu0 0.0
    %209 = vmatpush1.msra.mxu0 %v182
    %210 = vmatprep.subr.mxu0 0.0
    %211 = vmatpush1.msra.mxu0 0.0
    %212 = vmatprep.subr.mxu0 0.0
    %213 = vmatpush1.msra.mxu0 0.0
    %214 = vmatprep.subr.mxu0 0.0
    %215 = vmatpush1.msra.mxu0 0.0
    %216 = vmatprep.subr.mxu0 0.0
    %217 = vmatpush1.msra.mxu0 0.0
    %218 = vmatprep.subr.mxu0 0.0
    %219 = vmatpush1.msra.mxu0 0.0
    %220 = vmatprep.subr.mxu0 0.0
    %221 = vmatpush1.msra.mxu0 0.0
    %222 = vmatprep.subr.mxu0 0.0
    %223 = vmatpush1.msra.mxu0 0.0
    %224 = vmatprep.subr.mxu0 0.0
    %225 = vmatpush1.msra.mxu0 0.0
    %226 = vmatprep.subr.mxu0 0.0
    %227 = vmatpush1.msra.mxu0 0.0
    %228 = vmatprep.subr.mxu0 0.0
    %229 = vmatpush1.msra.mxu0 0.0
    %230 = vmatprep.subr.mxu0 0.0
    %231 = vmatpush1.msra.mxu0 0.0
    %232 = vmatprep.subr.mxu0 0.0
    %233 = vmatpush1.msra.mxu0 0.0
    %234 = vmatprep.subr.mxu0 0.0
    %235 = vmatpush1.msra.mxu0 0.0
    %236 = vmatprep.subr.mxu0 0.0
    %237 = vmatpush1.msra.mxu0 0.0
    %238 = vmatprep.subr.mxu0 0.0
    %239 = vmatpush1.msra.mxu0 0.0
    %240 = vmatprep.subr.mxu0 0.0
    %241 = vmatpush1.msra.mxu0 0.0
    %242 = vmatprep.subr.mxu0 0.0
    %243 = vmatpush1.msra.mxu0 0.0
    %244 = vmatprep.subr.mxu0 0.0
    %245 = vmatpush1.msra.mxu0 0.0
    %246 = vmatprep.subr.mxu0 0.0
    %247 = vmatpush1.msra.mxu0 0.0
    %248 = vmatprep.subr.mxu0 0.0
    %249 = vmatpush1.msra.mxu0 0.0
    %250 = vmatprep.subr.mxu0 0.0
    %251 = vmatpush1.msra.mxu0 0.0
    %252 = vmatprep.subr.mxu0 0.0
    %253 = vmatpush1.msra.mxu0 0.0
    %254 = vmatprep.subr.mxu0 0.0
    %255 = vmatpush1.msra.mxu0 0.0
    %256 = vmatprep.subr.mxu0 0.0
    %257 = vmatpush1.msra.mxu0 0.0
    %258 = vmatprep.subr.mxu0 0.0
    %259 = vmatpush1.msra.mxu0 0.0
    %260 = vmatprep.subr.mxu0 0.0
    %261 = vmatpush1.msra.mxu0 0.0
    %262 = vmatprep.subr.mxu0 0.0
    %263 = vmatpush1.msra.mxu0 0.0
    %264 = vmatprep.subr.mxu0 0.0
    %265 = vmatpush1.msra.mxu0 0.0
    %266 = vmatprep.mubr.f32.mxu0 0.0
    %267 = vmatmul.mubr.f32.gmra.mrb[0].mxu0 %v200
    %v268 = vpop.f32.mrb[0].mxu0
    %v269 = vadd.f32 0.0, %v268
    %v270 = vpop.f32.mrb[0].mxu0
    %271 = vdwg.mxu0
    %v272 = vadd.f32 %v141, %v269
    %v273 = vxor.u32 %v272, 2147483648
    %v274 = vmul.f32 %v273, 1.442695
    %v275 = vpow.pop %v274
    %v276 = vadd.f32 %v275, 1.0
    %v277 = vrcp.pop %v276
    %v278 = vmul.f32 1.0, %v277
    %v279 = vtanh.pop %v272
    %v280 = vmul.f32 %v278, 0.0
    %282 = vrot.lane.b32.xlu0 %v279, 64
    %v283 = vpop.permute.xlu0 %282
    %v285 = vmul.f32 %v278, %v283
    %287 = vrot.lane.b32.xlu0 %v285, 32
    %v288 = vpop.permute.xlu0 %287
    %v290 = vadd.f32 %v280, %v288
    %v291 = vtanh.pop %v290
    %293 = vrot.lane.b32.xlu0 %v291, 64
    %v294 = vpop.permute.xlu0 %293
    %v296 = vmul.f32 %v278, %v294
    %297 = vmatprep.subr.mxu0 0.0
    %298 = vmatpush1.msra.mxu0 %v187
    %299 = vmatprep.subr.mxu0 0.0
    %300 = vmatpush1.msra.mxu0 %v188
    %301 = vmatprep.subr.mxu0 0.0
    %302 = vmatpush1.msra.mxu0 %v189
    %303 = vmatprep.subr.mxu0 0.0
    %304 = vmatpush1.msra.mxu0 %v190
    %305 = vmatprep.subr.mxu0 0.0
    %306 = vmatpush1.msra.mxu0 0.0
    %307 = vmatprep.subr.mxu0 0.0
    %308 = vmatpush1.msra.mxu0 0.0
    %309 = vmatprep.subr.mxu0 0.0
    %310 = vmatpush1.msra.mxu0 0.0
    %311 = vmatprep.subr.mxu0 0.0
    %312 = vmatpush1.msra.mxu0 0.0
    %313 = vmatprep.subr.mxu0 0.0
    %314 = vmatpush1.msra.mxu0 0.0
    %315 = vmatprep.subr.mxu0 0.0
    %316 = vmatpush1.msra.mxu0 0.0
    %317 = vmatprep.subr.mxu0 0.0
    %318 = vmatpush1.msra.mxu0 0.0
    %319 = vmatprep.subr.mxu0 0.0
    %320 = vmatpush1.msra.mxu0 0.0
    %321 = vmatprep.subr.mxu0 0.0
    %322 = vmatpush1.msra.mxu0 0.0
    %323 = vmatprep.subr.mxu0 0.0
    %324 = vmatpush1.msra.mxu0 0.0
    %325 = vmatprep.subr.mxu0 0.0
    %326 = vmatpush1.msra.mxu0 0.0
    %327 = vmatprep.subr.mxu0 0.0
    %328 = vmatpush1.msra.mxu0 0.0
    %329 = vmatprep.subr.mxu0 0.0
    %330 = vmatpush1.msra.mxu0 0.0
    %331 = vmatprep.subr.mxu0 0.0
    %332 = vmatpush1.msra.mxu0 0.0
    %333 = vmatprep.subr.mxu0 0.0
    %334 = vmatpush1.msra.mxu0 0.0
    %335 = vmatprep.subr.mxu0 0.0
    %336 = vmatpush1.msra.mxu0 0.0
    %337 = vmatprep.subr.mxu0 0.0
    %338 = vmatpush1.msra.mxu0 0.0
    %339 = vmatprep.subr.mxu0 0.0
    %340 = vmatpush1.msra.mxu0 0.0
    %341 = vmatprep.subr.mxu0 0.0
    %342 = vmatpush1.msra.mxu0 0.0
    %343 = vmatprep.subr.mxu0 0.0
    %344 = vmatpush1.msra.mxu0 0.0
    %345 = vmatprep.subr.mxu0 0.0
    %346 = vmatpush1.msra.mxu0 0.0
    %347 = vmatprep.subr.mxu0 0.0
    %348 = vmatpush1.msra.mxu0 0.0
    %349 = vmatprep.subr.mxu0 0.0
    %350 = vmatpush1.msra.mxu0 0.0
    %351 = vmatprep.subr.mxu0 0.0
    %352 = vmatpush1.msra.mxu0 0.0
    %353 = vmatprep.subr.mxu0 0.0
    %354 = vmatpush1.msra.mxu0 0.0
    %355 = vmatprep.subr.mxu0 0.0
    %356 = vmatpush1.msra.mxu0 0.0
    %357 = vmatprep.subr.mxu0 0.0
    %358 = vmatpush1.msra.mxu0 0.0
    %359 = vmatprep.subr.mxu0 0.0
    %360 = vmatpush1.msra.mxu0 0.0
    %361 = vmatprep.mubr.f32.mxu0 0.0
    %362 = vmatmul.mubr.f32.gmra.mrb[0].mxu0 %v200
    %v363 = vpop.f32.mrb[0].mxu0
    %v364 = vadd.f32 0.0, %v363
    %v365 = vpop.f32.mrb[0].mxu0
    %366 = vdwg.mxu0
    %368 = vrot.lane.b32.xlu0 %v296, 32
    %v369 = vpop.permute.xlu0 %368
    %v370 = vsel %vm198, %v369, 0
    %372 = vmatprep.subr.mxu0 0.0
    %373 = vmatpush1.msra.mxu0 %v183
    %374 = vmatprep.subr.mxu0 0.0
    %375 = vmatpush1.msra.mxu0 %v184
    %376 = vmatprep.subr.mxu0 0.0
    %377 = vmatpush1.msra.mxu0 %v185
    %378 = vmatprep.subr.mxu0 0.0
    %379 = vmatpush1.msra.mxu0 %v186
    %380 = vmatprep.subr.mxu0 0.0
    %381 = vmatpush1.msra.mxu0 0.0
    %382 = vmatprep.subr.mxu0 0.0
    %383 = vmatpush1.msra.mxu0 0.0
    %384 = vmatprep.subr.mxu0 0.0
    %385 = vmatpush1.msra.mxu0 0.0
    %386 = vmatprep.subr.mxu0 0.0
    %387 = vmatpush1.msra.mxu0 0.0
    %388 = vmatprep.subr.mxu0 0.0
    %389 = vmatpush1.msra.mxu0 0.0
    %390 = vmatprep.subr.mxu0 0.0
    %391 = vmatpush1.msra.mxu0 0.0
    %392 = vmatprep.subr.mxu0 0.0
    %393 = vmatpush1.msra.mxu0 0.0
    %394 = vmatprep.subr.mxu0 0.0
    %395 = vmatpush1.msra.mxu0 0.0
    %396 = vmatprep.subr.mxu0 0.0
    %397 = vmatpush1.msra.mxu0 0.0
    %398 = vmatprep.subr.mxu0 0.0
    %399 = vmatpush1.msra.mxu0 0.0
    %400 = vmatprep.subr.mxu0 0.0
    %401 = vmatpush1.msra.mxu0 0.0
    %402 = vmatprep.subr.mxu0 0.0
    %403 = vmatpush1.msra.mxu0 0.0
    %404 = vmatprep.subr.mxu0 0.0
    %405 = vmatpush1.msra.mxu0 0.0
    %406 = vmatprep.subr.mxu0 0.0
    %407 = vmatpush1.msra.mxu0 0.0
    %408 = vmatprep.subr.mxu0 0.0
    %409 = vmatpush1.msra.mxu0 0.0
    %410 = vmatprep.subr.mxu0 0.0
    %411 = vmatpush1.msra.mxu0 0.0
    %412 = vmatprep.subr.mxu0 0.0
    %413 = vmatpush1.msra.mxu0 0.0
    %414 = vmatprep.subr.mxu0 0.0
    %415 = vmatpush1.msra.mxu0 0.0
    %416 = vmatprep.subr.mxu0 0.0
    %417 = vmatpush1.msra.mxu0 0.0
    %418 = vmatprep.subr.mxu0 0.0
    %419 = vmatpush1.msra.mxu0 0.0
    %420 = vmatprep.subr.mxu0 0.0
    %421 = vmatpush1.msra.mxu0 0.0
    %422 = vmatprep.subr.mxu0 0.0
    %423 = vmatpush1.msra.mxu0 0.0
    %424 = vmatprep.subr.mxu0 0.0
    %425 = vmatpush1.msra.mxu0 0.0
    %426 = vmatprep.subr.mxu0 0.0
    %427 = vmatpush1.msra.mxu0 0.0
    %428 = vmatprep.subr.mxu0 0.0
    %429 = vmatpush1.msra.mxu0 0.0
    %430 = vmatprep.subr.mxu0 0.0
    %431 = vmatpush1.msra.mxu0 0.0
    %432 = vmatprep.subr.mxu0 0.0
    %433 = vmatpush1.msra.mxu0 0.0
    %434 = vmatprep.subr.mxu0 0.0
    %435 = vmatpush1.msra.mxu0 0.0
    %436 = vmatprep.mubr.f32.mxu0 0.0
    %437 = vmatmul.mubr.f32.gmra.mrb[0].mxu0 %v370
    %v438 = vpop.f32.mrb[0].mxu0
    %v439 = vadd.f32 %v364, %v438
    %v440 = vpop.f32.mrb[0].mxu0
    %441 = vdwg.mxu0
    %v442 = vadd.f32 %v439, %v196
    %v443 = vxor.u32 %v442, 2147483648
    %v444 = vmul.f32 %v443, 1.442695
    %v445 = vpow.pop %v444
    %v446 = vadd.f32 %v445, 1.0
    %v447 = vrcp.pop %v446
    %v448 = vmul.f32 1.0, %v447
    %v449 = vtanh.pop %v442
    %v450 = vmul.f32 %v448, 0.0
    %452 = vrot.lane.b32.xlu0 %v449, 64
    %v453 = vpop.permute.xlu0 %452
    %v455 = vmul.f32 %v448, %v453
    %457 = vrot.lane.b32.xlu0 %v455, 32
    %v458 = vpop.permute.xlu0 %457
    %v460 = vadd.f32 %v450, %v458
    %v461 = vtanh.pop %v460
    %463 = vrot.lane.b32.xlu0 %v461, 64
    %v464 = vpop.permute.xlu0 %463
    %v466 = vmul.f32 %v448, %v464
    %467 = vmatprep.subr.mxu0 0.0
    %468 = vmatpush1.msra.mxu0 %v179
    %469 = vmatprep.subr.mxu0 0.0
    %470 = vmatpush1.msra.mxu0 %v180
    %471 = vmatprep.subr.mxu0 0.0
    %472 = vmatpush1.msra.mxu0 %v181
    %473 = vmatprep.subr.mxu0 0.0
    %474 = vmatpush1.msra.mxu0 %v182
    %475 = vmatprep.subr.mxu0 0.0
    %476 = vmatpush1.msra.mxu0 0.0
    %477 = vmatprep.subr.mxu0 0.0
    %478 = vmatpush1.msra.mxu0 0.0
    %479 = vmatprep.subr.mxu0 0.0
    %480 = vmatpush1.msra.mxu0 0.0
    %481 = vmatprep.subr.mxu0 0.0
    %482 = vmatpush1.msra.mxu0 0.0
    %483 = vmatprep.subr.mxu0 0.0
    %484 = vmatpush1.msra.mxu0 0.0
    %485 = vmatprep.subr.mxu0 0.0
    %486 = vmatpush1.msra.mxu0 0.0
    %487 = vmatprep.subr.mxu0 0.0
    %488 = vmatpush1.msra.mxu0 0.0
    %489 = vmatprep.subr.mxu0 0.0
    %490 = vmatpush1.msra.mxu0 0.0
    %491 = vmatprep.subr.mxu0 0.0
    %492 = vmatpush1.msra.mxu0 0.0
    %493 = vmatprep.subr.mxu0 0.0
    %494 = vmatpush1.msra.mxu0 0.0
    %495 = vmatprep.subr.mxu0 0.0
    %496 = vmatpush1.msra.mxu0 0.0
    %497 = vmatprep.subr.mxu0 0.0
    %498 = vmatpush1.msra.mxu0 0.0
    %499 = vmatprep.subr.mxu0 0.0
    %500 = vmatpush1.msra.mxu0 0.0
    %501 = vmatprep.subr.mxu0 0.0
    %502 = vmatpush1.msra.mxu0 0.0
    %503 = vmatprep.subr.mxu0 0.0
    %504 = vmatpush1.msra.mxu0 0.0
    %505 = vmatprep.subr.mxu0 0.0
    %506 = vmatpush1.msra.mxu0 0.0
    %507 = vmatprep.subr.mxu0 0.0
    %508 = vmatpush1.msra.mxu0 0.0
    %509 = vmatprep.subr.mxu0 0.0
    %510 = vmatpush1.msra.mxu0 0.0
    %511 = vmatprep.subr.mxu0 0.0
    %512 = vmatpush1.msra.mxu0 0.0
    %513 = vmatprep.subr.mxu0 0.0
    %514 = vmatpush1.msra.mxu0 0.0
    %515 = vmatprep.subr.mxu0 0.0
    %516 = vmatpush1.msra.mxu0 0.0
    %517 = vmatprep.subr.mxu0 0.0
    %518 = vmatpush1.msra.mxu0 0.0
    %519 = vmatprep.subr.mxu0 0.0
    %520 = vmatpush1.msra.mxu0 0.0
    %521 = vmatprep.subr.mxu0 0.0
    %522 = vmatpush1.msra.mxu0 0.0
    %523 = vmatprep.subr.mxu0 0.0
    %524 = vmatpush1.msra.mxu0 0.0
    %525 = vmatprep.subr.mxu0 0.0
    %526 = vmatpush1.msra.mxu0 0.0
    %527 = vmatprep.subr.mxu0 0.0
    %528 = vmatpush1.msra.mxu0 0.0
    %529 = vmatprep.subr.mxu0 0.0
    %530 = vmatpush1.msra.mxu0 0.0
    %531 = vmatprep.mubr.f32.mxu0 0.0
    %532 = vmatmul.mubr.f32.gmra.mrb[0].mxu0 %v370
    %v533 = vpop.f32.mrb[0].mxu0
    %v534 = vadd.f32 0.0, %v533
    %v535 = vpop.f32.mrb[0].mxu0
    %536 = vdwg.mxu0
    %v537 = vadd.f32 %v146, %v534
    %v538 = vxor.u32 %v537, 2147483648
    %v539 = vmul.f32 %v538, 1.442695
    %v540 = vpow.pop %v539
    %v541 = vadd.f32 %v540, 1.0
    %v542 = vrcp.pop %v541
    %v543 = vmul.f32 1.0, %v542
    %v544 = vtanh.pop %v537
    %v545 = vmul.f32 %v543, %v290
    %547 = vrot.lane.b32.xlu0 %v544, 64
    %v548 = vpop.permute.xlu0 %547
    %v550 = vmul.f32 %v543, %v548
    %552 = vrot.lane.b32.xlu0 %v550, 32
    %v553 = vpop.permute.xlu0 %552
    %v555 = vadd.f32 %v545, %v553
    %v556 = vtanh.pop %v555
    %558 = vrot.lane.b32.xlu0 %v556, 64
    %v559 = vpop.permute.xlu0 %558
    %v561 = vmul.f32 %v543, %v559
    %563 = vrot.lane.b32.xlu0 %v466, 32
    %v564 = vpop.permute.xlu0 %563
    %v565 = vsel %vm198, %v564, 0
    %567 = vmatprep.subr.mxu0 0.0
    %568 = vmatpush1.msra.mxu0 %v187
    %569 = vmatprep.subr.mxu0 0.0
    %570 = vmatpush1.msra.mxu0 %v188
    %571 = vmatprep.subr.mxu0 0.0
    %572 = vmatpush1.msra.mxu0 %v189
    %573 = vmatprep.subr.mxu0 0.0
    %574 = vmatpush1.msra.mxu0 %v190
    %575 = vmatprep.subr.mxu0 0.0
    %576 = vmatpush1.msra.mxu0 0.0
    %577 = vmatprep.subr.mxu0 0.0
    %578 = vmatpush1.msra.mxu0 0.0
    %579 = vmatprep.subr.mxu0 0.0
    %580 = vmatpush1.msra.mxu0 0.0
    %581 = vmatprep.subr.mxu0 0.0
    %582 = vmatpush1.msra.mxu0 0.0
    %583 = vmatprep.subr.mxu0 0.0
    %584 = vmatpush1.msra.mxu0 0.0
    %585 = vmatprep.subr.mxu0 0.0
    %586 = vmatpush1.msra.mxu0 0.0
    %587 = vmatprep.subr.mxu0 0.0
    %588 = vmatpush1.msra.mxu0 0.0
    %589 = vmatprep.subr.mxu0 0.0
    %590 = vmatpush1.msra.mxu0 0.0
    %591 = vmatprep.subr.mxu0 0.0
    %592 = vmatpush1.msra.mxu0 0.0
    %593 = vmatprep.subr.mxu0 0.0
    %594 = vmatpush1.msra.mxu0 0.0
    %595 = vmatprep.subr.mxu0 0.0
    %596 = vmatpush1.msra.mxu0 0.0
    %597 = vmatprep.subr.mxu0 0.0
    %598 = vmatpush1.msra.mxu0 0.0
    %599 = vmatprep.subr.mxu0 0.0
    %600 = vmatpush1.msra.mxu0 0.0
    %601 = vmatprep.subr.mxu0 0.0
    %602 = vmatpush1.msra.mxu0 0.0
    %603 = vmatprep.subr.mxu0 0.0
    %604 = vmatpush1.msra.mxu0 0.0
    %605 = vmatprep.subr.mxu0 0.0
    %606 = vmatpush1.msra.mxu0 0.0
    %607 = vmatprep.subr.mxu0 0.0
    %608 = vmatpush1.msra.mxu0 0.0
    %609 = vmatprep.subr.mxu0 0.0
    %610 = vmatpush1.msra.mxu0 0.0
    %611 = vmatprep.subr.mxu0 0.0
    %612 = vmatpush1.msra.mxu0 0.0
    %613 = vmatprep.subr.mxu0 0.0
    %614 = vmatpush1.msra.mxu0 0.0
    %615 = vmatprep.subr.mxu0 0.0
    %616 = vmatpush1.msra.mxu0 0.0
    %617 = vmatprep.subr.mxu0 0.0
    %618 = vmatpush1.msra.mxu0 0.0
    %619 = vmatprep.subr.mxu0 0.0
    %620 = vmatpush1.msra.mxu0 0.0
    %621 = vmatprep.subr.mxu0 0.0
    %622 = vmatpush1.msra.mxu0 0.0
    %623 = vmatprep.subr.mxu0 0.0
    %624 = vmatpush1.msra.mxu0 0.0
    %625 = vmatprep.subr.mxu0 0.0
    %626 = vmatpush1.msra.mxu0 0.0
    %627 = vmatprep.subr.mxu0 0.0
    %628 = vmatpush1.msra.mxu0 0.0
    %629 = vmatprep.subr.mxu0 0.0
    %630 = vmatpush1.msra.mxu0 0.0
    %631 = vmatprep.mubr.f32.mxu0 0.0
    %632 = vmatmul.mubr.f32.gmra.mrb[0].mxu0 %v565
    %v633 = vpop.f32.mrb[0].mxu0
    %v634 = vadd.f32 0.0, %v633
    %v635 = vpop.f32.mrb[0].mxu0
    %636 = vdwg.mxu0
    %638 = vrot.lane.b32.xlu0 %v561, 32
    %v639 = vpop.permute.xlu0 %638
    %v640 = vsel %vm198, %v639, 0
    %642 = vmatprep.subr.mxu0 0.0
    %643 = vmatpush1.msra.mxu0 %v183
    %644 = vmatprep.subr.mxu0 0.0
    %645 = vmatpush1.msra.mxu0 %v184
    %646 = vmatprep.subr.mxu0 0.0
    %647 = vmatpush1.msra.mxu0 %v185
    %648 = vmatprep.subr.mxu0 0.0
    %649 = vmatpush1.msra.mxu0 %v186
    %650 = vmatprep.subr.mxu0 0.0
    %651 = vmatpush1.msra.mxu0 0.0
    %652 = vmatprep.subr.mxu0 0.0
    %653 = vmatpush1.msra.mxu0 0.0
    %654 = vmatprep.subr.mxu0 0.0
    %655 = vmatpush1.msra.mxu0 0.0
    %656 = vmatprep.subr.mxu0 0.0
    %657 = vmatpush1.msra.mxu0 0.0
    %658 = vmatprep.subr.mxu0 0.0
    %659 = vmatpush1.msra.mxu0 0.0
    %660 = vmatprep.subr.mxu0 0.0
    %661 = vmatpush1.msra.mxu0 0.0
    %662 = vmatprep.subr.mxu0 0.0
    %663 = vmatpush1.msra.mxu0 0.0
    %664 = vmatprep.subr.mxu0 0.0
    %665 = vmatpush1.msra.mxu0 0.0
    %666 = vmatprep.subr.mxu0 0.0
    %667 = vmatpush1.msra.mxu0 0.0
    %668 = vmatprep.subr.mxu0 0.0
    %669 = vmatpush1.msra.mxu0 0.0
    %670 = vmatprep.subr.mxu0 0.0
    %671 = vmatpush1.msra.mxu0 0.0
    %672 = vmatprep.subr.mxu0 0.0
    %673 = vmatpush1.msra.mxu0 0.0
    %674 = vmatprep.subr.mxu0 0.0
    %675 = vmatpush1.msra.mxu0 0.0
    %676 = vmatprep.subr.mxu0 0.0
    %677 = vmatpush1.msra.mxu0 0.0
    %678 = vmatprep.subr.mxu0 0.0
    %679 = vmatpush1.msra.mxu0 0.0
    %680 = vmatprep.subr.mxu0 0.0
    %681 = vmatpush1.msra.mxu0 0.0
    %682 = vmatprep.subr.mxu0 0.0
    %683 = vmatpush1.msra.mxu0 0.0
    %684 = vmatprep.subr.mxu0 0.0
    %685 = vmatpush1.msra.mxu0 0.0
    %686 = vmatprep.subr.mxu0 0.0
    %687 = vmatpush1.msra.mxu0 0.0
    %688 = vmatprep.subr.mxu0 0.0
    %689 = vmatpush1.msra.mxu0 0.0
    %690 = vmatprep.subr.mxu0 0.0
    %691 = vmatpush1.msra.mxu0 0.0
    %692 = vmatprep.subr.mxu0 0.0
    %693 = vmatpush1.msra.mxu0 0.0
    %694 = vmatprep.subr.mxu0 0.0
    %695 = vmatpush1.msra.mxu0 0.0
    %696 = vmatprep.subr.mxu0 0.0
    %697 = vmatpush1.msra.mxu0 0.0
    %698 = vmatprep.subr.mxu0 0.0
    %699 = vmatpush1.msra.mxu0 0.0
    %700 = vmatprep.subr.mxu0 0.0
    %701 = vmatpush1.msra.mxu0 0.0
    %702 = vmatprep.subr.mxu0 0.0
    %703 = vmatpush1.msra.mxu0 0.0
    %704 = vmatprep.subr.mxu0 0.0
    %705 = vmatpush1.msra.mxu0 0.0
    %706 = vmatprep.mubr.f32.mxu0 0.0
    %707 = vmatmul.mubr.f32.gmra.mrb[0].mxu0 %v640
    %v708 = vpop.f32.mrb[0].mxu0
    %v709 = vadd.f32 %v634, %v708
    %v710 = vpop.f32.mrb[0].mxu0
    %711 = vdwg.mxu0
    %v712 = vadd.f32 %v709, %v196
    %v713 = vxor.u32 %v712, 2147483648
    %v714 = vmul.f32 %v713, 1.442695
    %v715 = vpow.pop %v714
    %v716 = vadd.f32 %v715, 1.0
    %v717 = vrcp.pop %v716
    %v718 = vmul.f32 1.0, %v717
    %v719 = vtanh.pop %v712
    %v720 = vmul.f32 %v718, %v460
    %722 = vrot.lane.b32.xlu0 %v719, 64
    %v723 = vpop.permute.xlu0 %722
    %v725 = vmul.f32 %v718, %v723
    %727 = vrot.lane.b32.xlu0 %v725, 32
    %v728 = vpop.permute.xlu0 %727
    %v730 = vadd.f32 %v720, %v728
    %v731 = vtanh.pop %v730
    %733 = vrot.lane.b32.xlu0 %v731, 64
    %v734 = vpop.permute.xlu0 %733
    %v736 = vmul.f32 %v718, %v734
    %737 = vmatprep.subr.mxu0 0.0
    %738 = vmatpush1.msra.mxu0 %v179
    %739 = vmatprep.subr.mxu0 0.0
    %740 = vmatpush1.msra.mxu0 %v180
    %741 = vmatprep.subr.mxu0 0.0
    %742 = vmatpush1.msra.mxu0 %v181
    %743 = vmatprep.subr.mxu0 0.0
    %744 = vmatpush1.msra.mxu0 %v182
    %745 = vmatprep.subr.mxu0 0.0
    %746 = vmatpush1.msra.mxu0 0.0
    %747 = vmatprep.subr.mxu0 0.0
    %748 = vmatpush1.msra.mxu0 0.0
    %749 = vmatprep.subr.mxu0 0.0
    %750 = vmatpush1.msra.mxu0 0.0
    %751 = vmatprep.subr.mxu0 0.0
    %752 = vmatpush1.msra.mxu0 0.0
    %753 = vmatprep.subr.mxu0 0.0
    %754 = vmatpush1.msra.mxu0 0.0
    %755 = vmatprep.subr.mxu0 0.0
    %756 = vmatpush1.msra.mxu0 0.0
    %757 = vmatprep.subr.mxu0 0.0
    %758 = vmatpush1.msra.mxu0 0.0
    %759 = vmatprep.subr.mxu0 0.0
    %760 = vmatpush1.msra.mxu0 0.0
    %761 = vmatprep.subr.mxu0 0.0
    %762 = vmatpush1.msra.mxu0 0.0
    %763 = vmatprep.subr.mxu0 0.0
    %764 = vmatpush1.msra.mxu0 0.0
    %765 = vmatprep.subr.mxu0 0.0
    %766 = vmatpush1.msra.mxu0 0.0
    %767 = vmatprep.subr.mxu0 0.0
    %768 = vmatpush1.msra.mxu0 0.0
    %769 = vmatprep.subr.mxu0 0.0
    %770 = vmatpush1.msra.mxu0 0.0
    %771 = vmatprep.subr.mxu0 0.0
    %772 = vmatpush1.msra.mxu0 0.0
    %773 = vmatprep.subr.mxu0 0.0
    %774 = vmatpush1.msra.mxu0 0.0
    %775 = vmatprep.subr.mxu0 0.0
    %776 = vmatpush1.msra.mxu0 0.0
    %777 = vmatprep.subr.mxu0 0.0
    %778 = vmatpush1.msra.mxu0 0.0
    %779 = vmatprep.subr.mxu0 0.0
    %780 = vmatpush1.msra.mxu0 0.0
    %781 = vmatprep.subr.mxu0 0.0
    %782 = vmatpush1.msra.mxu0 0.0
    %783 = vmatprep.subr.mxu0 0.0
    %784 = vmatpush1.msra.mxu0 0.0
    %785 = vmatprep.subr.mxu0 0.0
    %786 = vmatpush1.msra.mxu0 0.0
    %787 = vmatprep.subr.mxu0 0.0
    %788 = vmatpush1.msra.mxu0 0.0
    %789 = vmatprep.subr.mxu0 0.0
    %790 = vmatpush1.msra.mxu0 0.0
    %791 = vmatprep.subr.mxu0 0.0
    %792 = vmatpush1.msra.mxu0 0.0
    %793 = vmatprep.subr.mxu0 0.0
    %794 = vmatpush1.msra.mxu0 0.0
    %795 = vmatprep.subr.mxu0 0.0
    %796 = vmatpush1.msra.mxu0 0.0
    %797 = vmatprep.subr.mxu0 0.0
    %798 = vmatpush1.msra.mxu0 0.0
    %799 = vmatprep.subr.mxu0 0.0
    %800 = vmatpush1.msra.mxu0 0.0
    %801 = vmatprep.mubr.f32.mxu0 0.0
    %802 = vmatmul.mubr.f32.gmra.mrb[0].mxu0 %v640
    %v803 = vpop.f32.mrb[0].mxu0
    %v804 = vadd.f32 0.0, %v803
    %v805 = vpop.f32.mrb[0].mxu0
    %806 = vdwg.mxu0
    %v807 = vadd.f32 %v151, %v804
    %v808 = vxor.u32 %v807, 2147483648
    %v809 = vmul.f32 %v808, 1.442695
    %v810 = vpow.pop %v809
    %v811 = vadd.f32 %v810, 1.0
    %v812 = vrcp.pop %v811
    %v813 = vmul.f32 1.0, %v812
    %v814 = vtanh.pop %v807
    %v815 = vmul.f32 %v813, %v555
    %817 = vrot.lane.b32.xlu0 %v814, 64
    %v818 = vpop.permute.xlu0 %817
    %v820 = vmul.f32 %v813, %v818
    %822 = vrot.lane.b32.xlu0 %v820, 32
    %v823 = vpop.permute.xlu0 %822
    %v825 = vadd.f32 %v815, %v823
    %v826 = vtanh.pop %v825
    %828 = vrot.lane.b32.xlu0 %v826, 64
    %v829 = vpop.permute.xlu0 %828
    %v831 = vmul.f32 %v813, %v829
    %833 = vrot.lane.b32.xlu0 %v736, 32
    %v834 = vpop.permute.xlu0 %833
    %v835 = vsel %vm198, %v834, 0
    %837 = vmatprep.subr.mxu0 0.0
    %838 = vmatpush1.msra.mxu0 %v187
    %839 = vmatprep.subr.mxu0 0.0
    %840 = vmatpush1.msra.mxu0 %v188
    %841 = vmatprep.subr.mxu0 0.0
    %842 = vmatpush1.msra.mxu0 %v189
    %843 = vmatprep.subr.mxu0 0.0
    %844 = vmatpush1.msra.mxu0 %v190
    %845 = vmatprep.subr.mxu0 0.0
    %846 = vmatpush1.msra.mxu0 0.0
    %847 = vmatprep.subr.mxu0 0.0
    %848 = vmatpush1.msra.mxu0 0.0
    %849 = vmatprep.subr.mxu0 0.0
    %850 = vmatpush1.msra.mxu0 0.0
    %851 = vmatprep.subr.mxu0 0.0
    %852 = vmatpush1.msra.mxu0 0.0
    %853 = vmatprep.subr.mxu0 0.0
    %854 = vmatpush1.msra.mxu0 0.0
    %855 = vmatprep.subr.mxu0 0.0
    %856 = vmatpush1.msra.mxu0 0.0
    %857 = vmatprep.subr.mxu0 0.0
    %858 = vmatpush1.msra.mxu0 0.0
    %859 = vmatprep.subr.mxu0 0.0
    %860 = vmatpush1.msra.mxu0 0.0
    %861 = vmatprep.subr.mxu0 0.0
    %862 = vmatpush1.msra.mxu0 0.0
    %863 = vmatprep.subr.mxu0 0.0
    %864 = vmatpush1.msra.mxu0 0.0
    %865 = vmatprep.subr.mxu0 0.0
    %866 = vmatpush1.msra.mxu0 0.0
    %867 = vmatprep.subr.mxu0 0.0
    %868 = vmatpush1.msra.mxu0 0.0
    %869 = vmatprep.subr.mxu0 0.0
    %870 = vmatpush1.msra.mxu0 0.0
    %871 = vmatprep.subr.mxu0 0.0
    %872 = vmatpush1.msra.mxu0 0.0
    %873 = vmatprep.subr.mxu0 0.0
    %874 = vmatpush1.msra.mxu0 0.0
    %875 = vmatprep.subr.mxu0 0.0
    %876 = vmatpush1.msra.mxu0 0.0
    %877 = vmatprep.subr.mxu0 0.0
    %878 = vmatpush1.msra.mxu0 0.0
    %879 = vmatprep.subr.mxu0 0.0
    %880 = vmatpush1.msra.mxu0 0.0
    %881 = vmatprep.subr.mxu0 0.0
    %882 = vmatpush1.msra.mxu0 0.0
    %883 = vmatprep.subr.mxu0 0.0
    %884 = vmatpush1.msra.mxu0 0.0
    %885 = vmatprep.subr.mxu0 0.0
    %886 = vmatpush1.msra.mxu0 0.0
    %887 = vmatprep.subr.mxu0 0.0
    %888 = vmatpush1.msra.mxu0 0.0
    %889 = vmatprep.subr.mxu0 0.0
    %890 = vmatpush1.msra.mxu0 0.0
    %891 = vmatprep.subr.mxu0 0.0
    %892 = vmatpush1.msra.mxu0 0.0
    %893 = vmatprep.subr.mxu0 0.0
    %894 = vmatpush1.msra.mxu0 0.0
    %895 = vmatprep.subr.mxu0 0.0
    %896 = vmatpush1.msra.mxu0 0.0
    %897 = vmatprep.subr.mxu0 0.0
    %898 = vmatpush1.msra.mxu0 0.0
    %899 = vmatprep.subr.mxu0 0.0
    %900 = vmatpush1.msra.mxu0 0.0
    %901 = vmatprep.mubr.f32.mxu0 0.0
    %902 = vmatmul.mubr.f32.gmra.mrb[0].mxu0 %v835
    %v903 = vpop.f32.mrb[0].mxu0
    %v904 = vadd.f32 0.0, %v903
    %v905 = vpop.f32.mrb[0].mxu0
    %906 = vdwg.mxu0
    %908 = vrot.lane.b32.xlu0 %v831, 32
    %v909 = vpop.permute.xlu0 %908
    %v910 = vsel %vm198, %v909, 0
    %912 = vmatprep.subr.mxu0 0.0
    %913 = vmatpush1.msra.mxu0 %v183
    %914 = vmatprep.subr.mxu0 0.0
    %915 = vmatpush1.msra.mxu0 %v184
    %916 = vmatprep.subr.mxu0 0.0
    %917 = vmatpush1.msra.mxu0 %v185
    %918 = vmatprep.subr.mxu0 0.0
    %919 = vmatpush1.msra.mxu0 %v186
    %920 = vmatprep.subr.mxu0 0.0
    %921 = vmatpush1.msra.mxu0 0.0
    %922 = vmatprep.subr.mxu0 0.0
    %923 = vmatpush1.msra.mxu0 0.0
    %924 = vmatprep.subr.mxu0 0.0
    %925 = vmatpush1.msra.mxu0 0.0
    %926 = vmatprep.subr.mxu0 0.0
    %927 = vmatpush1.msra.mxu0 0.0
    %928 = vmatprep.subr.mxu0 0.0
    %929 = vmatpush1.msra.mxu0 0.0
    %930 = vmatprep.subr.mxu0 0.0
    %931 = vmatpush1.msra.mxu0 0.0
    %932 = vmatprep.subr.mxu0 0.0
    %933 = vmatpush1.msra.mxu0 0.0
    %934 = vmatprep.subr.mxu0 0.0
    %935 = vmatpush1.msra.mxu0 0.0
    %936 = vmatprep.subr.mxu0 0.0
    %937 = vmatpush1.msra.mxu0 0.0
    %938 = vmatprep.subr.mxu0 0.0
    %939 = vmatpush1.msra.mxu0 0.0
    %940 = vmatprep.subr.mxu0 0.0
    %941 = vmatpush1.msra.mxu0 0.0
    %942 = vmatprep.subr.mxu0 0.0
    %943 = vmatpush1.msra.mxu0 0.0
    %944 = vmatprep.subr.mxu0 0.0
    %945 = vmatpush1.msra.mxu0 0.0
    %946 = vmatprep.subr.mxu0 0.0
    %947 = vmatpush1.msra.mxu0 0.0
    %948 = vmatprep.subr.mxu0 0.0
    %949 = vmatpush1.msra.mxu0 0.0
    %950 = vmatprep.subr.mxu0 0.0
    %951 = vmatpush1.msra.mxu0 0.0
    %952 = vmatprep.subr.mxu0 0.0
    %953 = vmatpush1.msra.mxu0 0.0
    %954 = vmatprep.subr.mxu0 0.0
    %955 = vmatpush1.msra.mxu0 0.0
    %956 = vmatprep.subr.mxu0 0.0
    %957 = vmatpush1.msra.mxu0 0.0
    %958 = vmatprep.subr.mxu0 0.0
    %959 = vmatpush1.msra.mxu0 0.0
    %960 = vmatprep.subr.mxu0 0.0
    %961 = vmatpush1.msra.mxu0 0.0
    %962 = vmatprep.subr.mxu0 0.0
    %963 = vmatpush1.msra.mxu0 0.0
    %964 = vmatprep.subr.mxu0 0.0
    %965 = vmatpush1.msra.mxu0 0.0
    %966 = vmatprep.subr.mxu0 0.0
    %967 = vmatpush1.msra.mxu0 0.0
    %968 = vmatprep.subr.mxu0 0.0
    %969 = vmatpush1.msra.mxu0 0.0
    %970 = vmatprep.subr.mxu0 0.0
    %971 = vmatpush1.msra.mxu0 0.0
    %972 = vmatprep.subr.mxu0 0.0
    %973 = vmatpush1.msra.mxu0 0.0
    %974 = vmatprep.subr.mxu0 0.0
    %975 = vmatpush1.msra.mxu0 0.0
    %976 = vmatprep.mubr.f32.mxu0 0.0
    %977 = vmatmul.mubr.f32.gmra.mrb[0].mxu0 %v910
    %v978 = vpop.f32.mrb[0].mxu0
    %v979 = vadd.f32 %v904, %v978
    %v980 = vpop.f32.mrb[0].mxu0
    %981 = vdwg.mxu0
    %v982 = vadd.f32 %v979, %v196
    %v983 = vxor.u32 %v982, 2147483648
    %v984 = vmul.f32 %v983, 1.442695
    %v985 = vpow.pop %v984
    %v986 = vadd.f32 %v985, 1.0
    %v987 = vrcp.pop %v986
    %v988 = vmul.f32 1.0, %v987
    %v989 = vtanh.pop %v982
    %v990 = vmul.f32 %v988, %v730
    %992 = vrot.lane.b32.xlu0 %v989, 64
    %v993 = vpop.permute.xlu0 %992
    %v995 = vmul.f32 %v988, %v993
    %997 = vrot.lane.b32.xlu0 %v995, 32
    %v998 = vpop.permute.xlu0 %997
    %v1000 = vadd.f32 %v990, %v998
    %v1001 = vtanh.pop %v1000
    %1003 = vrot.lane.b32.xlu0 %v1001, 64
    %v1004 = vpop.permute.xlu0 %1003
    %v1006 = vmul.f32 %v988, %v1004
    %1007 = vmatprep.subr.mxu0 0.0
    %1008 = vmatpush1.msra.mxu0 %v179
    %1009 = vmatprep.subr.mxu0 0.0
    %1010 = vmatpush1.msra.mxu0 %v180
    %1011 = vmatprep.subr.mxu0 0.0
    %1012 = vmatpush1.msra.mxu0 %v181
    %1013 = vmatprep.subr.mxu0 0.0
    %1014 = vmatpush1.msra.mxu0 %v182
    %1015 = vmatprep.subr.mxu0 0.0
    %1016 = vmatpush1.msra.mxu0 0.0
    %1017 = vmatprep.subr.mxu0 0.0
    %1018 = vmatpush1.msra.mxu0 0.0
    %1019 = vmatprep.subr.mxu0 0.0
    %1020 = vmatpush1.msra.mxu0 0.0
    %1021 = vmatprep.subr.mxu0 0.0
    %1022 = vmatpush1.msra.mxu0 0.0
    %1023 = vmatprep.subr.mxu0 0.0
    %1024 = vmatpush1.msra.mxu0 0.0
    %1025 = vmatprep.subr.mxu0 0.0
    %1026 = vmatpush1.msra.mxu0 0.0
    %1027 = vmatprep.subr.mxu0 0.0
    %1028 = vmatpush1.msra.mxu0 0.0
    %1029 = vmatprep.subr.mxu0 0.0
    %1030 = vmatpush1.msra.mxu0 0.0
    %1031 = vmatprep.subr.mxu0 0.0
    %1032 = vmatpush1.msra.mxu0 0.0
    %1033 = vmatprep.subr.mxu0 0.0
    %1034 = vmatpush1.msra.mxu0 0.0
    %1035 = vmatprep.subr.mxu0 0.0
    %1036 = vmatpush1.msra.mxu0 0.0
    %1037 = vmatprep.subr.mxu0 0.0
    %1038 = vmatpush1.msra.mxu0 0.0
    %1039 = vmatprep.subr.mxu0 0.0
    %1040 = vmatpush1.msra.mxu0 0.0
    %1041 = vmatprep.subr.mxu0 0.0
    %1042 = vmatpush1.msra.mxu0 0.0
    %1043 = vmatprep.subr.mxu0 0.0
    %1044 = vmatpush1.msra.mxu0 0.0
    %1045 = vmatprep.subr.mxu0 0.0
    %1046 = vmatpush1.msra.mxu0 0.0
    %1047 = vmatprep.subr.mxu0 0.0
    %1048 = vmatpush1.msra.mxu0 0.0
    %1049 = vmatprep.subr.mxu0 0.0
    %1050 = vmatpush1.msra.mxu0 0.0
    %1051 = vmatprep.subr.mxu0 0.0
    %1052 = vmatpush1.msra.mxu0 0.0
    %1053 = vmatprep.subr.mxu0 0.0
    %1054 = vmatpush1.msra.mxu0 0.0
    %1055 = vmatprep.subr.mxu0 0.0
    %1056 = vmatpush1.msra.mxu0 0.0
    %1057 = vmatprep.subr.mxu0 0.0
    %1058 = vmatpush1.msra.mxu0 0.0
    %1059 = vmatprep.subr.mxu0 0.0
    %1060 = vmatpush1.msra.mxu0 0.0
    %1061 = vmatprep.subr.mxu0 0.0
    %1062 = vmatpush1.msra.mxu0 0.0
    %1063 = vmatprep.subr.mxu0 0.0
    %1064 = vmatpush1.msra.mxu0 0.0
    %1065 = vmatprep.subr.mxu0 0.0
    %1066 = vmatpush1.msra.mxu0 0.0
    %1067 = vmatprep.subr.mxu0 0.0
    %1068 = vmatpush1.msra.mxu0 0.0
    %1069 = vmatprep.subr.mxu0 0.0
    %1070 = vmatpush1.msra.mxu0 0.0
    %1071 = vmatprep.mubr.f32.mxu0 0.0
    %1072 = vmatmul.mubr.f32.gmra.mrb[0].mxu0 %v910
    %v1073 = vpop.f32.mrb[0].mxu0
    %v1074 = vadd.f32 0.0, %v1073
    %v1075 = vpop.f32.mrb[0].mxu0
    %1076 = vdwg.mxu0
    %v1077 = vadd.f32 %v156, %v1074
    %v1078 = vxor.u32 %v1077, 2147483648
    %v1079 = vmul.f32 %v1078, 1.442695
    %v1080 = vpow.pop %v1079
    %v1081 = vadd.f32 %v1080, 1.0
    %v1082 = vrcp.pop %v1081
    %v1083 = vmul.f32 1.0, %v1082
    %v1084 = vtanh.pop %v1077
    %v1085 = vmul.f32 %v1083, %v825
    %1087 = vrot.lane.b32.xlu0 %v1084, 64
    %v1088 = vpop.permute.xlu0 %1087
    %v1090 = vmul.f32 %v1083, %v1088
    %1092 = vrot.lane.b32.xlu0 %v1090, 32
    %v1093 = vpop.permute.xlu0 %1092
    %v1095 = vadd.f32 %v1085, %v1093
    %v1096 = vtanh.pop %v1095
    %1098 = vrot.lane.b32.xlu0 %v1096, 64
    %v1099 = vpop.permute.xlu0 %1098
    %v1101 = vmul.f32 %v1083, %v1099
    %1103 = vrot.lane.b32.xlu0 %v1006, 32
    %v1104 = vpop.permute.xlu0 %1103
    %v1105 = vsel %vm198, %v1104, 0
    %1107 = vmatprep.subr.mxu0 0.0
    %1108 = vmatpush1.msra.mxu0 %v187
    %1109 = vmatprep.subr.mxu0 0.0
    %1110 = vmatpush1.msra.mxu0 %v188
    %1111 = vmatprep.subr.mxu0 0.0
    %1112 = vmatpush1.msra.mxu0 %v189
    %1113 = vmatprep.subr.mxu0 0.0
    %1114 = vmatpush1.msra.mxu0 %v190
    %1115 = vmatprep.subr.mxu0 0.0
    %1116 = vmatpush1.msra.mxu0 0.0
    %1117 = vmatprep.subr.mxu0 0.0
    %1118 = vmatpush1.msra.mxu0 0.0
    %1119 = vmatprep.subr.mxu0 0.0
    %1120 = vmatpush1.msra.mxu0 0.0
    %1121 = vmatprep.subr.mxu0 0.0
    %1122 = vmatpush1.msra.mxu0 0.0
    %1123 = vmatprep.subr.mxu0 0.0
    %1124 = vmatpush1.msra.mxu0 0.0
    %1125 = vmatprep.subr.mxu0 0.0
    %1126 = vmatpush1.msra.mxu0 0.0
    %1127 = vmatprep.subr.mxu0 0.0
    %1128 = vmatpush1.msra.mxu0 0.0
    %1129 = vmatprep.subr.mxu0 0.0
    %1130 = vmatpush1.msra.mxu0 0.0
    %1131 = vmatprep.subr.mxu0 0.0
    %1132 = vmatpush1.msra.mxu0 0.0
    %1133 = vmatprep.subr.mxu0 0.0
    %1134 = vmatpush1.msra.mxu0 0.0
    %1135 = vmatprep.subr.mxu0 0.0
    %1136 = vmatpush1.msra.mxu0 0.0
    %1137 = vmatprep.subr.mxu0 0.0
    %1138 = vmatpush1.msra.mxu0 0.0
    %1139 = vmatprep.subr.mxu0 0.0
    %1140 = vmatpush1.msra.mxu0 0.0
    %1141 = vmatprep.subr.mxu0 0.0
    %1142 = vmatpush1.msra.mxu0 0.0
    %1143 = vmatprep.subr.mxu0 0.0
    %1144 = vmatpush1.msra.mxu0 0.0
    %1145 = vmatprep.subr.mxu0 0.0
    %1146 = vmatpush1.msra.mxu0 0.0
    %1147 = vmatprep.subr.mxu0 0.0
    %1148 = vmatpush1.msra.mxu0 0.0
    %1149 = vmatprep.subr.mxu0 0.0
    %1150 = vmatpush1.msra.mxu0 0.0
    %1151 = vmatprep.subr.mxu0 0.0
    %1152 = vmatpush1.msra.mxu0 0.0
    %1153 = vmatprep.subr.mxu0 0.0
    %1154 = vmatpush1.msra.mxu0 0.0
    %1155 = vmatprep.subr.mxu0 0.0
    %1156 = vmatpush1.msra.mxu0 0.0
    %1157 = vmatprep.subr.mxu0 0.0
    %1158 = vmatpush1.msra.mxu0 0.0
    %1159 = vmatprep.subr.mxu0 0.0
    %1160 = vmatpush1.msra.mxu0 0.0
    %1161 = vmatprep.subr.mxu0 0.0
    %1162 = vmatpush1.msra.mxu0 0.0
    %1163 = vmatprep.subr.mxu0 0.0
    %1164 = vmatpush1.msra.mxu0 0.0
    %1165 = vmatprep.subr.mxu0 0.0
    %1166 = vmatpush1.msra.mxu0 0.0
    %1167 = vmatprep.subr.mxu0 0.0
    %1168 = vmatpush1.msra.mxu0 0.0
    %1169 = vmatprep.subr.mxu0 0.0
    %1170 = vmatpush1.msra.mxu0 0.0
    %1171 = vmatprep.mubr.f32.mxu0 0.0
    %1172 = vmatmul.mubr.f32.gmra.mrb[0].mxu0 %v1105
    %v1173 = vpop.f32.mrb[0].mxu0
    %v1174 = vadd.f32 0.0, %v1173
    %v1175 = vpop.f32.mrb[0].mxu0
    %1176 = vdwg.mxu0
    %1178 = vrot.lane.b32.xlu0 %v1101, 32
    %v1179 = vpop.permute.xlu0 %1178
    %v1180 = vsel %vm198, %v1179, 0
    %1182 = vmatprep.subr.mxu0 0.0
    %1183 = vmatpush1.msra.mxu0 %v183
    %1184 = vmatprep.subr.mxu0 0.0
    %1185 = vmatpush1.msra.mxu0 %v184
    %1186 = vmatprep.subr.mxu0 0.0
    %1187 = vmatpush1.msra.mxu0 %v185
    %1188 = vmatprep.subr.mxu0 0.0
    %1189 = vmatpush1.msra.mxu0 %v186
    %1190 = vmatprep.subr.mxu0 0.0
    %1191 = vmatpush1.msra.mxu0 0.0
    %1192 = vmatprep.subr.mxu0 0.0
    %1193 = vmatpush1.msra.mxu0 0.0
    %1194 = vmatprep.subr.mxu0 0.0
    %1195 = vmatpush1.msra.mxu0 0.0
    %1196 = vmatprep.subr.mxu0 0.0
    %1197 = vmatpush1.msra.mxu0 0.0
    %1198 = vmatprep.subr.mxu0 0.0
    %1199 = vmatpush1.msra.mxu0 0.0
    %1200 = vmatprep.subr.mxu0 0.0
    %1201 = vmatpush1.msra.mxu0 0.0
    %1202 = vmatprep.subr.mxu0 0.0
    %1203 = vmatpush1.msra.mxu0 0.0
    %1204 = vmatprep.subr.mxu0 0.0
    %1205 = vmatpush1.msra.mxu0 0.0
    %1206 = vmatprep.subr.mxu0 0.0
    %1207 = vmatpush1.msra.mxu0 0.0
    %1208 = vmatprep.subr.mxu0 0.0
    %1209 = vmatpush1.msra.mxu0 0.0
    %1210 = vmatprep.subr.mxu0 0.0
    %1211 = vmatpush1.msra.mxu0 0.0
    %1212 = vmatprep.subr.mxu0 0.0
    %1213 = vmatpush1.msra.mxu0 0.0
    %1214 = vmatprep.subr.mxu0 0.0
    %1215 = vmatpush1.msra.mxu0 0.0
    %1216 = vmatprep.subr.mxu0 0.0
    %1217 = vmatpush1.msra.mxu0 0.0
    %1218 = vmatprep.subr.mxu0 0.0
    %1219 = vmatpush1.msra.mxu0 0.0
    %1220 = vmatprep.subr.mxu0 0.0
    %1221 = vmatpush1.msra.mxu0 0.0
    %1222 = vmatprep.subr.mxu0 0.0
    %1223 = vmatpush1.msra.mxu0 0.0
    %1224 = vmatprep.subr.mxu0 0.0
    %1225 = vmatpush1.msra.mxu0 0.0
    %1226 = vmatprep.subr.mxu0 0.0
    %1227 = vmatpush1.msra.mxu0 0.0
    %1228 = vmatprep.subr.mxu0 0.0
    %1229 = vmatpush1.msra.mxu0 0.0
    %1230 = vmatprep.subr.mxu0 0.0
    %1231 = vmatpush1.msra.mxu0 0.0
    %1232 = vmatprep.subr.mxu0 0.0
    %1233 = vmatpush1.msra.mxu0 0.0
    %1234 = vmatprep.subr.mxu0 0.0
    %1235 = vmatpush1.msra.mxu0 0.0
    %1236 = vmatprep.subr.mxu0 0.0
    %1237 = vmatpush1.msra.mxu0 0.0
    %1238 = vmatprep.subr.mxu0 0.0
    %1239 = vmatpush1.msra.mxu0 0.0
    %1240 = vmatprep.subr.mxu0 0.0
    %1241 = vmatpush1.msra.mxu0 0.0
    %1242 = vmatprep.subr.mxu0 0.0
    %1243 = vmatpush1.msra.mxu0 0.0
    %1244 = vmatprep.subr.mxu0 0.0
    %1245 = vmatpush1.msra.mxu0 0.0
    %1246 = vmatprep.mubr.f32.mxu0 0.0
    %1247 = vmatmul.mubr.f32.gmra.mrb[0].mxu0 %v1180
    %v1248 = vpop.f32.mrb[0].mxu0
    %v1249 = vadd.f32 %v1174, %v1248
    %v1250 = vpop.f32.mrb[0].mxu0
    %1251 = vdwg.mxu0
    %v1252 = vadd.f32 %v1249, %v196
    %v1253 = vxor.u32 %v1252, 2147483648
    %v1254 = vmul.f32 %v1253, 1.442695
    %v1255 = vpow.pop %v1254
    %v1256 = vadd.f32 %v1255, 1.0
    %v1257 = vrcp.pop %v1256
    %v1258 = vmul.f32 1.0, %v1257
    %v1259 = vtanh.pop %v1252
    %v1260 = vmul.f32 %v1258, %v1000
    %1262 = vrot.lane.b32.xlu0 %v1259, 64
    %v1263 = vpop.permute.xlu0 %1262
    %v1265 = vmul.f32 %v1258, %v1263
    %1267 = vrot.lane.b32.xlu0 %v1265, 32
    %v1268 = vpop.permute.xlu0 %1267
    %v1270 = vadd.f32 %v1260, %v1268
    %v1271 = vtanh.pop %v1270
    %1273 = vrot.lane.b32.xlu0 %v1271, 64
    %v1274 = vpop.permute.xlu0 %1273
    %v1276 = vmul.f32 %v1258, %v1274
    %1277 = vmatprep.subr.mxu0 0.0
    %1278 = vmatpush1.msra.mxu0 %v179
    %1279 = vmatprep.subr.mxu0 0.0
    %1280 = vmatpush1.msra.mxu0 %v180
    %1281 = vmatprep.subr.mxu0 0.0
    %1282 = vmatpush1.msra.mxu0 %v181
    %1283 = vmatprep.subr.mxu0 0.0
    %1284 = vmatpush1.msra.mxu0 %v182
    %1285 = vmatprep.subr.mxu0 0.0
    %1286 = vmatpush1.msra.mxu0 0.0
    %1287 = vmatprep.subr.mxu0 0.0
    %1288 = vmatpush1.msra.mxu0 0.0
    %1289 = vmatprep.subr.mxu0 0.0
    %1290 = vmatpush1.msra.mxu0 0.0
    %1291 = vmatprep.subr.mxu0 0.0
    %1292 = vmatpush1.msra.mxu0 0.0
    %1293 = vmatprep.subr.mxu0 0.0
    %1294 = vmatpush1.msra.mxu0 0.0
    %1295 = vmatprep.subr.mxu0 0.0
    %1296 = vmatpush1.msra.mxu0 0.0
    %1297 = vmatprep.subr.mxu0 0.0
    %1298 = vmatpush1.msra.mxu0 0.0
    %1299 = vmatprep.subr.mxu0 0.0
    %1300 = vmatpush1.msra.mxu0 0.0
    %1301 = vmatprep.subr.mxu0 0.0
    %1302 = vmatpush1.msra.mxu0 0.0
    %1303 = vmatprep.subr.mxu0 0.0
    %1304 = vmatpush1.msra.mxu0 0.0
    %1305 = vmatprep.subr.mxu0 0.0
    %1306 = vmatpush1.msra.mxu0 0.0
    %1307 = vmatprep.subr.mxu0 0.0
    %1308 = vmatpush1.msra.mxu0 0.0
    %1309 = vmatprep.subr.mxu0 0.0
    %1310 = vmatpush1.msra.mxu0 0.0
    %1311 = vmatprep.subr.mxu0 0.0
    %1312 = vmatpush1.msra.mxu0 0.0
    %1313 = vmatprep.subr.mxu0 0.0
    %1314 = vmatpush1.msra.mxu0 0.0
    %1315 = vmatprep.subr.mxu0 0.0
    %1316 = vmatpush1.msra.mxu0 0.0
    %1317 = vmatprep.subr.mxu0 0.0
    %1318 = vmatpush1.msra.mxu0 0.0
    %1319 = vmatprep.subr.mxu0 0.0
    %1320 = vmatpush1.msra.mxu0 0.0
    %1321 = vmatprep.subr.mxu0 0.0
    %1322 = vmatpush1.msra.mxu0 0.0
    %1323 = vmatprep.subr.mxu0 0.0
    %1324 = vmatpush1.msra.mxu0 0.0
    %1325 = vmatprep.subr.mxu0 0.0
    %1326 = vmatpush1.msra.mxu0 0.0
    %1327 = vmatprep.subr.mxu0 0.0
    %1328 = vmatpush1.msra.mxu0 0.0
    %1329 = vmatprep.subr.mxu0 0.0
    %1330 = vmatpush1.msra.mxu0 0.0
    %1331 = vmatprep.subr.mxu0 0.0
    %1332 = vmatpush1.msra.mxu0 0.0
    %1333 = vmatprep.subr.mxu0 0.0
    %1334 = vmatpush1.msra.mxu0 0.0
    %1335 = vmatprep.subr.mxu0 0.0
    %1336 = vmatpush1.msra.mxu0 0.0
    %1337 = vmatprep.subr.mxu0 0.0
    %1338 = vmatpush1.msra.mxu0 0.0
    %1339 = vmatprep.subr.mxu0 0.0
    %1340 = vmatpush1.msra.mxu0 0.0
    %1341 = vmatprep.mubr.f32.mxu0 0.0
    %1342 = vmatmul.mubr.f32.gmra.mrb[0].mxu0 %v1180
    %v1343 = vpop.f32.mrb[0].mxu0
    %v1344 = vadd.f32 0.0, %v1343
    %v1345 = vpop.f32.mrb[0].mxu0
    %1346 = vdwg.mxu0
    %v1347 = vadd.f32 %v161, %v1344
    %v1348 = vxor.u32 %v1347, 2147483648
    %v1349 = vmul.f32 %v1348, 1.442695
    %v1350 = vpow.pop %v1349
    %v1351 = vadd.f32 %v1350, 1.0
    %v1352 = vrcp.pop %v1351
    %v1353 = vmul.f32 1.0, %v1352
    %v1354 = vtanh.pop %v1347
    %v1355 = vmul.f32 %v1353, %v1095
    %1357 = vrot.lane.b32.xlu0 %v1354, 64
    %v1358 = vpop.permute.xlu0 %1357
    %v1360 = vmul.f32 %v1353, %v1358
    %1362 = vrot.lane.b32.xlu0 %v1360, 32
    %v1363 = vpop.permute.xlu0 %1362
    %v1365 = vadd.f32 %v1355, %v1363
    %v1366 = vtanh.pop %v1365
    %1368 = vrot.lane.b32.xlu0 %v1366, 64
    %v1369 = vpop.permute.xlu0 %1368
    %v1371 = vmul.f32 %v1353, %v1369
    %1373 = vrot.lane.b32.xlu0 %v1276, 32
    %v1374 = vpop.permute.xlu0 %1373
    %v1375 = vsel %vm198, %v1374, 0
    %1377 = vmatprep.subr.mxu0 0.0
    %1378 = vmatpush1.msra.mxu0 %v187
    %1379 = vmatprep.subr.mxu0 0.0
    %1380 = vmatpush1.msra.mxu0 %v188
    %1381 = vmatprep.subr.mxu0 0.0
    %1382 = vmatpush1.msra.mxu0 %v189
    %1383 = vmatprep.subr.mxu0 0.0
    %1384 = vmatpush1.msra.mxu0 %v190
    %1385 = vmatprep.subr.mxu0 0.0
    %1386 = vmatpush1.msra.mxu0 0.0
    %1387 = vmatprep.subr.mxu0 0.0
    %1388 = vmatpush1.msra.mxu0 0.0
    %1389 = vmatprep.subr.mxu0 0.0
    %1390 = vmatpush1.msra.mxu0 0.0
    %1391 = vmatprep.subr.mxu0 0.0
    %1392 = vmatpush1.msra.mxu0 0.0
    %1393 = vmatprep.subr.mxu0 0.0
    %1394 = vmatpush1.msra.mxu0 0.0
    %1395 = vmatprep.subr.mxu0 0.0
    %1396 = vmatpush1.msra.mxu0 0.0
    %1397 = vmatprep.subr.mxu0 0.0
    %1398 = vmatpush1.msra.mxu0 0.0
    %1399 = vmatprep.subr.mxu0 0.0
    %1400 = vmatpush1.msra.mxu0 0.0
    %1401 = vmatprep.subr.mxu0 0.0
    %1402 = vmatpush1.msra.mxu0 0.0
    %1403 = vmatprep.subr.mxu0 0.0
    %1404 = vmatpush1.msra.mxu0 0.0
    %1405 = vmatprep.subr.mxu0 0.0
    %1406 = vmatpush1.msra.mxu0 0.0
    %1407 = vmatprep.subr.mxu0 0.0
    %1408 = vmatpush1.msra.mxu0 0.0
    %1409 = vmatprep.subr.mxu0 0.0
    %1410 = vmatpush1.msra.mxu0 0.0
    %1411 = vmatprep.subr.mxu0 0.0
    %1412 = vmatpush1.msra.mxu0 0.0
    %1413 = vmatprep.subr.mxu0 0.0
    %1414 = vmatpush1.msra.mxu0 0.0
    %1415 = vmatprep.subr.mxu0 0.0
    %1416 = vmatpush1.msra.mxu0 0.0
    %1417 = vmatprep.subr.mxu0 0.0
    %1418 = vmatpush1.msra.mxu0 0.0
    %1419 = vmatprep.subr.mxu0 0.0
    %1420 = vmatpush1.msra.mxu0 0.0
    %1421 = vmatprep.subr.mxu0 0.0
    %1422 = vmatpush1.msra.mxu0 0.0
    %1423 = vmatprep.subr.mxu0 0.0
    %1424 = vmatpush1.msra.mxu0 0.0
    %1425 = vmatprep.subr.mxu0 0.0
    %1426 = vmatpush1.msra.mxu0 0.0
    %1427 = vmatprep.subr.mxu0 0.0
    %1428 = vmatpush1.msra.mxu0 0.0
    %1429 = vmatprep.subr.mxu0 0.0
    %1430 = vmatpush1.msra.mxu0 0.0
    %1431 = vmatprep.subr.mxu0 0.0
    %1432 = vmatpush1.msra.mxu0 0.0
    %1433 = vmatprep.subr.mxu0 0.0
    %1434 = vmatpush1.msra.mxu0 0.0
    %1435 = vmatprep.subr.mxu0 0.0
    %1436 = vmatpush1.msra.mxu0 0.0
    %1437 = vmatprep.subr.mxu0 0.0
    %1438 = vmatpush1.msra.mxu0 0.0
    %1439 = vmatprep.subr.mxu0 0.0
    %1440 = vmatpush1.msra.mxu0 0.0
    %1441 = vmatprep.mubr.f32.mxu0 0.0
    %1442 = vmatmul.mubr.f32.gmra.mrb[0].mxu0 %v1375
    %v1443 = vpop.f32.mrb[0].mxu0
    %v1444 = vadd.f32 0.0, %v1443
    %v1445 = vpop.f32.mrb[0].mxu0
    %1446 = vdwg.mxu0
    %1448 = vrot.lane.b32.xlu0 %v1371, 32
    %v1449 = vpop.permute.xlu0 %1448
    %v1450 = vsel %vm198, %v1449, 0
    %1452 = vmatprep.subr.mxu0 0.0
    %1453 = vmatpush1.msra.mxu0 %v183
    %1454 = vmatprep.subr.mxu0 0.0
    %1455 = vmatpush1.msra.mxu0 %v184
    %1456 = vmatprep.subr.mxu0 0.0
    %1457 = vmatpush1.msra.mxu0 %v185
    %1458 = vmatprep.subr.mxu0 0.0
    %1459 = vmatpush1.msra.mxu0 %v186
    %1460 = vmatprep.subr.mxu0 0.0
    %1461 = vmatpush1.msra.mxu0 0.0
    %1462 = vmatprep.subr.mxu0 0.0
    %1463 = vmatpush1.msra.mxu0 0.0
    %1464 = vmatprep.subr.mxu0 0.0
    %1465 = vmatpush1.msra.mxu0 0.0
    %1466 = vmatprep.subr.mxu0 0.0
    %1467 = vmatpush1.msra.mxu0 0.0
    %1468 = vmatprep.subr.mxu0 0.0
    %1469 = vmatpush1.msra.mxu0 0.0
    %1470 = vmatprep.subr.mxu0 0.0
    %1471 = vmatpush1.msra.mxu0 0.0
    %1472 = vmatprep.subr.mxu0 0.0
    %1473 = vmatpush1.msra.mxu0 0.0
    %1474 = vmatprep.subr.mxu0 0.0
    %1475 = vmatpush1.msra.mxu0 0.0
    %1476 = vmatprep.subr.mxu0 0.0
    %1477 = vmatpush1.msra.mxu0 0.0
    %1478 = vmatprep.subr.mxu0 0.0
    %1479 = vmatpush1.msra.mxu0 0.0
    %1480 = vmatprep.subr.mxu0 0.0
    %1481 = vmatpush1.msra.mxu0 0.0
    %1482 = vmatprep.subr.mxu0 0.0
    %1483 = vmatpush1.msra.mxu0 0.0
    %1484 = vmatprep.subr.mxu0 0.0
    %1485 = vmatpush1.msra.mxu0 0.0
    %1486 = vmatprep.subr.mxu0 0.0
    %1487 = vmatpush1.msra.mxu0 0.0
    %1488 = vmatprep.subr.mxu0 0.0
    %1489 = vmatpush1.msra.mxu0 0.0
    %1490 = vmatprep.subr.mxu0 0.0
    %1491 = vmatpush1.msra.mxu0 0.0
    %1492 = vmatprep.subr.mxu0 0.0
    %1493 = vmatpush1.msra.mxu0 0.0
    %1494 = vmatprep.subr.mxu0 0.0
    %1495 = vmatpush1.msra.mxu0 0.0
    %1496 = vmatprep.subr.mxu0 0.0
    %1497 = vmatpush1.msra.mxu0 0.0
    %1498 = vmatprep.subr.mxu0 0.0
    %1499 = vmatpush1.msra.mxu0 0.0
    %1500 = vmatprep.subr.mxu0 0.0
    %1501 = vmatpush1.msra.mxu0 0.0
    %1502 = vmatprep.subr.mxu0 0.0
    %1503 = vmatpush1.msra.mxu0 0.0
    %1504 = vmatprep.subr.mxu0 0.0
    %1505 = vmatpush1.msra.mxu0 0.0
    %1506 = vmatprep.subr.mxu0 0.0
    %1507 = vmatpush1.msra.mxu0 0.0
    %1508 = vmatprep.subr.mxu0 0.0
    %1509 = vmatpush1.msra.mxu0 0.0
    %1510 = vmatprep.subr.mxu0 0.0
    %1511 = vmatpush1.msra.mxu0 0.0
    %1512 = vmatprep.subr.mxu0 0.0
    %1513 = vmatpush1.msra.mxu0 0.0
    %1514 = vmatprep.subr.mxu0 0.0
    %1515 = vmatpush1.msra.mxu0 0.0
    %1516 = vmatprep.mubr.f32.mxu0 0.0
    %1517 = vmatmul.mubr.f32.gmra.mrb[0].mxu0 %v1450
    %v1518 = vpop.f32.mrb[0].mxu0
    %v1519 = vadd.f32 %v1444, %v1518
    %v1520 = vpop.f32.mrb[0].mxu0
    %1521 = vdwg.mxu0
    %v1522 = vadd.f32 %v1519, %v196
    %v1523 = vxor.u32 %v1522, 2147483648
    %v1524 = vmul.f32 %v1523, 1.442695
    %v1525 = vpow.pop %v1524
    %v1526 = vadd.f32 %v1525, 1.0
    %v1527 = vrcp.pop %v1526
    %v1528 = vmul.f32 1.0, %v1527
    %v1529 = vtanh.pop %v1522
    %v1530 = vmul.f32 %v1528, %v1270
    %1532 = vrot.lane.b32.xlu0 %v1529, 64
    %v1533 = vpop.permute.xlu0 %1532
    %v1535 = vmul.f32 %v1528, %v1533
    %1537 = vrot.lane.b32.xlu0 %v1535, 32
    %v1538 = vpop.permute.xlu0 %1537
    %v1540 = vadd.f32 %v1530, %v1538
    %v1541 = vtanh.pop %v1540
    %1543 = vrot.lane.b32.xlu0 %v1541, 64
    %v1544 = vpop.permute.xlu0 %1543
    %v1546 = vmul.f32 %v1528, %v1544
    %1547 = vmatprep.subr.mxu0 0.0
    %1548 = vmatpush1.msra.mxu0 %v179
    %1549 = vmatprep.subr.mxu0 0.0
    %1550 = vmatpush1.msra.mxu0 %v180
    %1551 = vmatprep.subr.mxu0 0.0
    %1552 = vmatpush1.msra.mxu0 %v181
    %1553 = vmatprep.subr.mxu0 0.0
    %1554 = vmatpush1.msra.mxu0 %v182
    %1555 = vmatprep.subr.mxu0 0.0
    %1556 = vmatpush1.msra.mxu0 0.0
    %1557 = vmatprep.subr.mxu0 0.0
    %1558 = vmatpush1.msra.mxu0 0.0
    %1559 = vmatprep.subr.mxu0 0.0
    %1560 = vmatpush1.msra.mxu0 0.0
    %1561 = vmatprep.subr.mxu0 0.0
    %1562 = vmatpush1.msra.mxu0 0.0
    %1563 = vmatprep.subr.mxu0 0.0
    %1564 = vmatpush1.msra.mxu0 0.0
    %1565 = vmatprep.subr.mxu0 0.0
    %1566 = vmatpush1.msra.mxu0 0.0
    %1567 = vmatprep.subr.mxu0 0.0
    %1568 = vmatpush1.msra.mxu0 0.0
    %1569 = vmatprep.subr.mxu0 0.0
    %1570 = vmatpush1.msra.mxu0 0.0
    %1571 = vmatprep.subr.mxu0 0.0
    %1572 = vmatpush1.msra.mxu0 0.0
    %1573 = vmatprep.subr.mxu0 0.0
    %1574 = vmatpush1.msra.mxu0 0.0
    %1575 = vmatprep.subr.mxu0 0.0
    %1576 = vmatpush1.msra.mxu0 0.0
    %1577 = vmatprep.subr.mxu0 0.0
    %1578 = vmatpush1.msra.mxu0 0.0
    %1579 = vmatprep.subr.mxu0 0.0
    %1580 = vmatpush1.msra.mxu0 0.0
    %1581 = vmatprep.subr.mxu0 0.0
    %1582 = vmatpush1.msra.mxu0 0.0
    %1583 = vmatprep.subr.mxu0 0.0
    %1584 = vmatpush1.msra.mxu0 0.0
    %1585 = vmatprep.subr.mxu0 0.0
    %1586 = vmatpush1.msra.mxu0 0.0
    %1587 = vmatprep.subr.mxu0 0.0
    %1588 = vmatpush1.msra.mxu0 0.0
    %1589 = vmatprep.subr.mxu0 0.0
    %1590 = vmatpush1.msra.mxu0 0.0
    %1591 = vmatprep.subr.mxu0 0.0
    %1592 = vmatpush1.msra.mxu0 0.0
    %1593 = vmatprep.subr.mxu0 0.0
    %1594 = vmatpush1.msra.mxu0 0.0
    %1595 = vmatprep.subr.mxu0 0.0
    %1596 = vmatpush1.msra.mxu0 0.0
    %1597 = vmatprep.subr.mxu0 0.0
    %1598 = vmatpush1.msra.mxu0 0.0
    %1599 = vmatprep.subr.mxu0 0.0
    %1600 = vmatpush1.msra.mxu0 0.0
    %1601 = vmatprep.subr.mxu0 0.0
    %1602 = vmatpush1.msra.mxu0 0.0
    %1603 = vmatprep.subr.mxu0 0.0
    %1604 = vmatpush1.msra.mxu0 0.0
    %1605 = vmatprep.subr.mxu0 0.0
    %1606 = vmatpush1.msra.mxu0 0.0
    %1607 = vmatprep.subr.mxu0 0.0
    %1608 = vmatpush1.msra.mxu0 0.0
    %1609 = vmatprep.subr.mxu0 0.0
    %1610 = vmatpush1.msra.mxu0 0.0
    %1611 = vmatprep.mubr.f32.mxu0 0.0
    %1612 = vmatmul.mubr.f32.gmra.mrb[0].mxu0 %v1450
    %v1613 = vpop.f32.mrb[0].mxu0
    %v1614 = vadd.f32 0.0, %v1613
    %v1615 = vpop.f32.mrb[0].mxu0
    %1616 = vdwg.mxu0
    %v1617 = vadd.f32 %v166, %v1614
    %v1618 = vxor.u32 %v1617, 2147483648
    %v1619 = vmul.f32 %v1618, 1.442695
    %v1620 = vpow.pop %v1619
    %v1621 = vadd.f32 %v1620, 1.0
    %v1622 = vrcp.pop %v1621
    %v1623 = vmul.f32 1.0, %v1622
    %v1624 = vtanh.pop %v1617
    %v1625 = vmul.f32 %v1623, %v1365
    %1627 = vrot.lane.b32.xlu0 %v1624, 64
    %v1628 = vpop.permute.xlu0 %1627
    %v1630 = vmul.f32 %v1623, %v1628
    %1632 = vrot.lane.b32.xlu0 %v1630, 32
    %v1633 = vpop.permute.xlu0 %1632
    %v1635 = vadd.f32 %v1625, %v1633
    %v1636 = vtanh.pop %v1635
    %1638 = vrot.lane.b32.xlu0 %v1636, 64
    %v1639 = vpop.permute.xlu0 %1638
    %v1641 = vmul.f32 %v1623, %v1639
    %1643 = vrot.lane.b32.xlu0 %v1546, 32
    %v1644 = vpop.permute.xlu0 %1643
    %v1645 = vsel %vm198, %v1644, 0
    %1647 = vmatprep.subr.mxu0 0.0
    %1648 = vmatpush1.msra.mxu0 %v187
    %1649 = vmatprep.subr.mxu0 0.0
    %1650 = vmatpush1.msra.mxu0 %v188
    %1651 = vmatprep.subr.mxu0 0.0
    %1652 = vmatpush1.msra.mxu0 %v189
    %1653 = vmatprep.subr.mxu0 0.0
    %1654 = vmatpush1.msra.mxu0 %v190
    %1655 = vmatprep.subr.mxu0 0.0
    %1656 = vmatpush1.msra.mxu0 0.0
    %1657 = vmatprep.subr.mxu0 0.0
    %1658 = vmatpush1.msra.mxu0 0.0
    %1659 = vmatprep.subr.mxu0 0.0
    %1660 = vmatpush1.msra.mxu0 0.0
    %1661 = vmatprep.subr.mxu0 0.0
    %1662 = vmatpush1.msra.mxu0 0.0
    %1663 = vmatprep.subr.mxu0 0.0
    %1664 = vmatpush1.msra.mxu0 0.0
    %1665 = vmatprep.subr.mxu0 0.0
    %1666 = vmatpush1.msra.mxu0 0.0
    %1667 = vmatprep.subr.mxu0 0.0
    %1668 = vmatpush1.msra.mxu0 0.0
    %1669 = vmatprep.subr.mxu0 0.0
    %1670 = vmatpush1.msra.mxu0 0.0
    %1671 = vmatprep.subr.mxu0 0.0
    %1672 = vmatpush1.msra.mxu0 0.0
    %1673 = vmatprep.subr.mxu0 0.0
    %1674 = vmatpush1.msra.mxu0 0.0
    %1675 = vmatprep.subr.mxu0 0.0
    %1676 = vmatpush1.msra.mxu0 0.0
    %1677 = vmatprep.subr.mxu0 0.0
    %1678 = vmatpush1.msra.mxu0 0.0
    %1679 = vmatprep.subr.mxu0 0.0
    %1680 = vmatpush1.msra.mxu0 0.0
    %1681 = vmatprep.subr.mxu0 0.0
    %1682 = vmatpush1.msra.mxu0 0.0
    %1683 = vmatprep.subr.mxu0 0.0
    %1684 = vmatpush1.msra.mxu0 0.0
    %1685 = vmatprep.subr.mxu0 0.0
    %1686 = vmatpush1.msra.mxu0 0.0
    %1687 = vmatprep.subr.mxu0 0.0
    %1688 = vmatpush1.msra.mxu0 0.0
    %1689 = vmatprep.subr.mxu0 0.0
    %1690 = vmatpush1.msra.mxu0 0.0
    %1691 = vmatprep.subr.mxu0 0.0
    %1692 = vmatpush1.msra.mxu0 0.0
    %1693 = vmatprep.subr.mxu0 0.0
    %1694 = vmatpush1.msra.mxu0 0.0
    %1695 = vmatprep.subr.mxu0 0.0
    %1696 = vmatpush1.msra.mxu0 0.0
    %1697 = vmatprep.subr.mxu0 0.0
    %1698 = vmatpush1.msra.mxu0 0.0
    %1699 = vmatprep.subr.mxu0 0.0
    %1700 = vmatpush1.msra.mxu0 0.0
    %1701 = vmatprep.subr.mxu0 0.0
    %1702 = vmatpush1.msra.mxu0 0.0
    %1703 = vmatprep.subr.mxu0 0.0
    %1704 = vmatpush1.msra.mxu0 0.0
    %1705 = vmatprep.subr.mxu0 0.0
    %1706 = vmatpush1.msra.mxu0 0.0
    %1707 = vmatprep.subr.mxu0 0.0
    %1708 = vmatpush1.msra.mxu0 0.0
    %1709 = vmatprep.subr.mxu0 0.0
    %1710 = vmatpush1.msra.mxu0 0.0
    %1711 = vmatprep.mubr.f32.mxu0 0.0
    %1712 = vmatmul.mubr.f32.gmra.mrb[0].mxu0 %v1645
    %v1713 = vpop.f32.mrb[0].mxu0
    %v1714 = vadd.f32 0.0, %v1713
    %v1715 = vpop.f32.mrb[0].mxu0
    %1716 = vdwg.mxu0
    %1718 = vrot.lane.b32.xlu0 %v1641, 32
    %v1719 = vpop.permute.xlu0 %1718
    %v1720 = vsel %vm198, %v1719, 0
    %1722 = vmatprep.subr.mxu0 0.0
    %1723 = vmatpush1.msra.mxu0 %v183
    %1724 = vmatprep.subr.mxu0 0.0
    %1725 = vmatpush1.msra.mxu0 %v184
    %1726 = vmatprep.subr.mxu0 0.0
    %1727 = vmatpush1.msra.mxu0 %v185
    %1728 = vmatprep.subr.mxu0 0.0
    %1729 = vmatpush1.msra.mxu0 %v186
    %1730 = vmatprep.subr.mxu0 0.0
    %1731 = vmatpush1.msra.mxu0 0.0
    %1732 = vmatprep.subr.mxu0 0.0
    %1733 = vmatpush1.msra.mxu0 0.0
    %1734 = vmatprep.subr.mxu0 0.0
    %1735 = vmatpush1.msra.mxu0 0.0
    %1736 = vmatprep.subr.mxu0 0.0
    %1737 = vmatpush1.msra.mxu0 0.0
    %1738 = vmatprep.subr.mxu0 0.0
    %1739 = vmatpush1.msra.mxu0 0.0
    %1740 = vmatprep.subr.mxu0 0.0
    %1741 = vmatpush1.msra.mxu0 0.0
    %1742 = vmatprep.subr.mxu0 0.0
    %1743 = vmatpush1.msra.mxu0 0.0
    %1744 = vmatprep.subr.mxu0 0.0
    %1745 = vmatpush1.msra.mxu0 0.0
    %1746 = vmatprep.subr.mxu0 0.0
    %1747 = vmatpush1.msra.mxu0 0.0
    %1748 = vmatprep.subr.mxu0 0.0
    %1749 = vmatpush1.msra.mxu0 0.0
    %1750 = vmatprep.subr.mxu0 0.0
    %1751 = vmatpush1.msra.mxu0 0.0
    %1752 = vmatprep.subr.mxu0 0.0
    %1753 = vmatpush1.msra.mxu0 0.0
    %1754 = vmatprep.subr.mxu0 0.0
    %1755 = vmatpush1.msra.mxu0 0.0
    %1756 = vmatprep.subr.mxu0 0.0
    %1757 = vmatpush1.msra.mxu0 0.0
    %1758 = vmatprep.subr.mxu0 0.0
    %1759 = vmatpush1.msra.mxu0 0.0
    %1760 = vmatprep.subr.mxu0 0.0
    %1761 = vmatpush1.msra.mxu0 0.0
    %1762 = vmatprep.subr.mxu0 0.0
    %1763 = vmatpush1.msra.mxu0 0.0
    %1764 = vmatprep.subr.mxu0 0.0
    %1765 = vmatpush1.msra.mxu0 0.0
    %1766 = vmatprep.subr.mxu0 0.0
    %1767 = vmatpush1.msra.mxu0 0.0
    %1768 = vmatprep.subr.mxu0 0.0
    %1769 = vmatpush1.msra.mxu0 0.0
    %1770 = vmatprep.subr.mxu0 0.0
    %1771 = vmatpush1.msra.mxu0 0.0
    %1772 = vmatprep.subr.mxu0 0.0
    %1773 = vmatpush1.msra.mxu0 0.0
    %1774 = vmatprep.subr.mxu0 0.0
    %1775 = vmatpush1.msra.mxu0 0.0
    %1776 = vmatprep.subr.mxu0 0.0
    %1777 = vmatpush1.msra.mxu0 0.0
    %1778 = vmatprep.subr.mxu0 0.0
    %1779 = vmatpush1.msra.mxu0 0.0
    %1780 = vmatprep.subr.mxu0 0.0
    %1781 = vmatpush1.msra.mxu0 0.0
    %1782 = vmatprep.subr.mxu0 0.0
    %1783 = vmatpush1.msra.mxu0 0.0
    %1784 = vmatprep.subr.mxu0 0.0
    %1785 = vmatpush1.msra.mxu0 0.0
    %1786 = vmatprep.mubr.f32.mxu0 0.0
    %1787 = vmatmul.mubr.f32.gmra.mrb[0].mxu0 %v1720
    %v1788 = vpop.f32.mrb[0].mxu0
    %v1789 = vadd.f32 %v1714, %v1788
    %v1790 = vpop.f32.mrb[0].mxu0
    %1791 = vdwg.mxu0
    %v1792 = vadd.f32 %v1789, %v196
    %v1793 = vxor.u32 %v1792, 2147483648
    %v1794 = vmul.f32 %v1793, 1.442695
    %v1795 = vpow.pop %v1794
    %v1796 = vadd.f32 %v1795, 1.0
    %v1797 = vrcp.pop %v1796
    %v1798 = vmul.f32 1.0, %v1797
    %v1799 = vtanh.pop %v1792
    %v1800 = vmul.f32 %v1798, %v1540
    %1802 = vrot.lane.b32.xlu0 %v1799, 64
    %v1803 = vpop.permute.xlu0 %1802
    %v1805 = vmul.f32 %v1798, %v1803
    %1807 = vrot.lane.b32.xlu0 %v1805, 32
    %v1808 = vpop.permute.xlu0 %1807
    %v1810 = vadd.f32 %v1800, %v1808
    %v1811 = vtanh.pop %v1810
    %1813 = vrot.lane.b32.xlu0 %v1811, 64
    %v1814 = vpop.permute.xlu0 %1813
    %v1816 = vmul.f32 %v1798, %v1814
    %1817 = vmatprep.subr.mxu0 0.0
    %1818 = vmatpush1.msra.mxu0 %v179
    %1819 = vmatprep.subr.mxu0 0.0
    %1820 = vmatpush1.msra.mxu0 %v180
    %1821 = vmatprep.subr.mxu0 0.0
    %1822 = vmatpush1.msra.mxu0 %v181
    %1823 = vmatprep.subr.mxu0 0.0
    %1824 = vmatpush1.msra.mxu0 %v182
    %1825 = vmatprep.subr.mxu0 0.0
    %1826 = vmatpush1.msra.mxu0 0.0
    %1827 = vmatprep.subr.mxu0 0.0
    %1828 = vmatpush1.msra.mxu0 0.0
    %1829 = vmatprep.subr.mxu0 0.0
    %1830 = vmatpush1.msra.mxu0 0.0
    %1831 = vmatprep.subr.mxu0 0.0
    %1832 = vmatpush1.msra.mxu0 0.0
    %1833 = vmatprep.subr.mxu0 0.0
    %1834 = vmatpush1.msra.mxu0 0.0
    %1835 = vmatprep.subr.mxu0 0.0
    %1836 = vmatpush1.msra.mxu0 0.0
    %1837 = vmatprep.subr.mxu0 0.0
    %1838 = vmatpush1.msra.mxu0 0.0
    %1839 = vmatprep.subr.mxu0 0.0
    %1840 = vmatpush1.msra.mxu0 0.0
    %1841 = vmatprep.subr.mxu0 0.0
    %1842 = vmatpush1.msra.mxu0 0.0
    %1843 = vmatprep.subr.mxu0 0.0
    %1844 = vmatpush1.msra.mxu0 0.0
    %1845 = vmatprep.subr.mxu0 0.0
    %1846 = vmatpush1.msra.mxu0 0.0
    %1847 = vmatprep.subr.mxu0 0.0
    %1848 = vmatpush1.msra.mxu0 0.0
    %1849 = vmatprep.subr.mxu0 0.0
    %1850 = vmatpush1.msra.mxu0 0.0
    %1851 = vmatprep.subr.mxu0 0.0
    %1852 = vmatpush1.msra.mxu0 0.0
    %1853 = vmatprep.subr.mxu0 0.0
    %1854 = vmatpush1.msra.mxu0 0.0
    %1855 = vmatprep.subr.mxu0 0.0
    %1856 = vmatpush1.msra.mxu0 0.0
    %1857 = vmatprep.subr.mxu0 0.0
    %1858 = vmatpush1.msra.mxu0 0.0
    %1859 = vmatprep.subr.mxu0 0.0
    %1860 = vmatpush1.msra.mxu0 0.0
    %1861 = vmatprep.subr.mxu0 0.0
    %1862 = vmatpush1.msra.mxu0 0.0
    %1863 = vmatprep.subr.mxu0 0.0
    %1864 = vmatpush1.msra.mxu0 0.0
    %1865 = vmatprep.subr.mxu0 0.0
    %1866 = vmatpush1.msra.mxu0 0.0
    %1867 = vmatprep.subr.mxu0 0.0
    %1868 = vmatpush1.msra.mxu0 0.0
    %1869 = vmatprep.subr.mxu0 0.0
    %1870 = vmatpush1.msra.mxu0 0.0
    %1871 = vmatprep.subr.mxu0 0.0
    %1872 = vmatpush1.msra.mxu0 0.0
    %1873 = vmatprep.subr.mxu0 0.0
    %1874 = vmatpush1.msra.mxu0 0.0
    %1875 = vmatprep.subr.mxu0 0.0
    %1876 = vmatpush1.msra.mxu0 0.0
    %1877 = vmatprep.subr.mxu0 0.0
    %1878 = vmatpush1.msra.mxu0 0.0
    %1879 = vmatprep.subr.mxu0 0.0
    %1880 = vmatpush1.msra.mxu0 0.0
    %1881 = vmatprep.mubr.f32.mxu0 0.0
    %1882 = vmatmul.mubr.f32.gmra.mrb[0].mxu0 %v1720
    %v1883 = vpop.f32.mrb[0].mxu0
    %v1884 = vadd.f32 0.0, %v1883
    %v1885 = vpop.f32.mrb[0].mxu0
    %1886 = vdwg.mxu0
    %v1887 = vadd.f32 %v171, %v1884
    %v1888 = vxor.u32 %v1887, 2147483648
    %v1889 = vmul.f32 %v1888, 1.442695
    %v1890 = vpow.pop %v1889
    %v1891 = vadd.f32 %v1890, 1.0
    %v1892 = vrcp.pop %v1891
    %v1893 = vmul.f32 1.0, %v1892
    %v1894 = vtanh.pop %v1887
    %v1895 = vmul.f32 %v1893, %v1635
    %1897 = vrot.lane.b32.xlu0 %v1894, 64
    %v1898 = vpop.permute.xlu0 %1897
    %v1900 = vmul.f32 %v1893, %v1898
    %1902 = vrot.lane.b32.xlu0 %v1900, 32
    %v1903 = vpop.permute.xlu0 %1902
    %v1905 = vadd.f32 %v1895, %v1903
    %v1906 = vtanh.pop %v1905
    %1908 = vrot.lane.b32.xlu0 %v1906, 64
    %v1909 = vpop.permute.xlu0 %1908
    %v1911 = vmul.f32 %v1893, %v1909
    %1913 = vrot.lane.b32.xlu0 %v1816, 32
    %v1914 = vpop.permute.xlu0 %1913
    %v1915 = vsel %vm198, %v1914, 0
    %1917 = vmatprep.subr.mxu0 0.0
    %1918 = vmatpush1.msra.mxu0 %v187
    %1919 = vmatprep.subr.mxu0 0.0
    %1920 = vmatpush1.msra.mxu0 %v188
    %1921 = vmatprep.subr.mxu0 0.0
    %1922 = vmatpush1.msra.mxu0 %v189
    %1923 = vmatprep.subr.mxu0 0.0
    %1924 = vmatpush1.msra.mxu0 %v190
    %1925 = vmatprep.subr.mxu0 0.0
    %1926 = vmatpush1.msra.mxu0 0.0
    %1927 = vmatprep.subr.mxu0 0.0
    %1928 = vmatpush1.msra.mxu0 0.0
    %1929 = vmatprep.subr.mxu0 0.0
    %1930 = vmatpush1.msra.mxu0 0.0
    %1931 = vmatprep.subr.mxu0 0.0
    %1932 = vmatpush1.msra.mxu0 0.0
    %1933 = vmatprep.subr.mxu0 0.0
    %1934 = vmatpush1.msra.mxu0 0.0
    %1935 = vmatprep.subr.mxu0 0.0
    %1936 = vmatpush1.msra.mxu0 0.0
    %1937 = vmatprep.subr.mxu0 0.0
    %1938 = vmatpush1.msra.mxu0 0.0
    %1939 = vmatprep.subr.mxu0 0.0
    %1940 = vmatpush1.msra.mxu0 0.0
    %1941 = vmatprep.subr.mxu0 0.0
    %1942 = vmatpush1.msra.mxu0 0.0
    %1943 = vmatprep.subr.mxu0 0.0
    %1944 = vmatpush1.msra.mxu0 0.0
    %1945 = vmatprep.subr.mxu0 0.0
    %1946 = vmatpush1.msra.mxu0 0.0
    %1947 = vmatprep.subr.mxu0 0.0
    %1948 = vmatpush1.msra.mxu0 0.0
    %1949 = vmatprep.subr.mxu0 0.0
    %1950 = vmatpush1.msra.mxu0 0.0
    %1951 = vmatprep.subr.mxu0 0.0
    %1952 = vmatpush1.msra.mxu0 0.0
    %1953 = vmatprep.subr.mxu0 0.0
    %1954 = vmatpush1.msra.mxu0 0.0
    %1955 = vmatprep.subr.mxu0 0.0
    %1956 = vmatpush1.msra.mxu0 0.0
    %1957 = vmatprep.subr.mxu0 0.0
    %1958 = vmatpush1.msra.mxu0 0.0
    %1959 = vmatprep.subr.mxu0 0.0
    %1960 = vmatpush1.msra.mxu0 0.0
    %1961 = vmatprep.subr.mxu0 0.0
    %1962 = vmatpush1.msra.mxu0 0.0
    %1963 = vmatprep.subr.mxu0 0.0
    %1964 = vmatpush1.msra.mxu0 0.0
    %1965 = vmatprep.subr.mxu0 0.0
    %1966 = vmatpush1.msra.mxu0 0.0
    %1967 = vmatprep.subr.mxu0 0.0
    %1968 = vmatpush1.msra.mxu0 0.0
    %1969 = vmatprep.subr.mxu0 0.0
    %1970 = vmatpush1.msra.mxu0 0.0
    %1971 = vmatprep.subr.mxu0 0.0
    %1972 = vmatpush1.msra.mxu0 0.0
    %1973 = vmatprep.subr.mxu0 0.0
    %1974 = vmatpush1.msra.mxu0 0.0
    %1975 = vmatprep.subr.mxu0 0.0
    %1976 = vmatpush1.msra.mxu0 0.0
    %1977 = vmatprep.subr.mxu0 0.0
    %1978 = vmatpush1.msra.mxu0 0.0
    %1979 = vmatprep.subr.mxu0 0.0
    %1980 = vmatpush1.msra.mxu0 0.0
    %1981 = vmatprep.mubr.f32.mxu0 0.0
    %1982 = vmatmul.mubr.f32.gmra.mrb[0].mxu0 %v1915
    %v1983 = vpop.f32.mrb[0].mxu0
    %v1984 = vadd.f32 0.0, %v1983
    %v1985 = vpop.f32.mrb[0].mxu0
    %1986 = vdwg.mxu0
    %1988 = vrot.lane.b32.xlu0 %v1911, 32
    %v1989 = vpop.permute.xlu0 %1988
    %v1990 = vsel %vm198, %v1989, 0
    %1992 = vmatprep.subr.mxu0 0.0
    %1993 = vmatpush1.msra.mxu0 %v183
    %1994 = vmatprep.subr.mxu0 0.0
    %1995 = vmatpush1.msra.mxu0 %v184
    %1996 = vmatprep.subr.mxu0 0.0
    %1997 = vmatpush1.msra.mxu0 %v185
    %1998 = vmatprep.subr.mxu0 0.0
    %1999 = vmatpush1.msra.mxu0 %v186
    %2000 = vmatprep.subr.mxu0 0.0
    %2001 = vmatpush1.msra.mxu0 0.0
    %2002 = vmatprep.subr.mxu0 0.0
    %2003 = vmatpush1.msra.mxu0 0.0
    %2004 = vmatprep.subr.mxu0 0.0
    %2005 = vmatpush1.msra.mxu0 0.0
    %2006 = vmatprep.subr.mxu0 0.0
    %2007 = vmatpush1.msra.mxu0 0.0
    %2008 = vmatprep.subr.mxu0 0.0
    %2009 = vmatpush1.msra.mxu0 0.0
    %2010 = vmatprep.subr.mxu0 0.0
    %2011 = vmatpush1.msra.mxu0 0.0
    %2012 = vmatprep.subr.mxu0 0.0
    %2013 = vmatpush1.msra.mxu0 0.0
    %2014 = vmatprep.subr.mxu0 0.0
    %2015 = vmatpush1.msra.mxu0 0.0
    %2016 = vmatprep.subr.mxu0 0.0
    %2017 = vmatpush1.msra.mxu0 0.0
    %2018 = vmatprep.subr.mxu0 0.0
    %2019 = vmatpush1.msra.mxu0 0.0
    %2020 = vmatprep.subr.mxu0 0.0
    %2021 = vmatpush1.msra.mxu0 0.0
    %2022 = vmatprep.subr.mxu0 0.0
    %2023 = vmatpush1.msra.mxu0 0.0
    %2024 = vmatprep.subr.mxu0 0.0
    %2025 = vmatpush1.msra.mxu0 0.0
    %2026 = vmatprep.subr.mxu0 0.0
    %2027 = vmatpush1.msra.mxu0 0.0
    %2028 = vmatprep.subr.mxu0 0.0
    %2029 = vmatpush1.msra.mxu0 0.0
    %2030 = vmatprep.subr.mxu0 0.0
    %2031 = vmatpush1.msra.mxu0 0.0
    %2032 = vmatprep.subr.mxu0 0.0
    %2033 = vmatpush1.msra.mxu0 0.0
    %2034 = vmatprep.subr.mxu0 0.0
    %2035 = vmatpush1.msra.mxu0 0.0
    %2036 = vmatprep.subr.mxu0 0.0
    %2037 = vmatpush1.msra.mxu0 0.0
    %2038 = vmatprep.subr.mxu0 0.0
    %2039 = vmatpush1.msra.mxu0 0.0
    %2040 = vmatprep.subr.mxu0 0.0
    %2041 = vmatpush1.msra.mxu0 0.0
    %2042 = vmatprep.subr.mxu0 0.0
    %2043 = vmatpush1.msra.mxu0 0.0
    %2044 = vmatprep.subr.mxu0 0.0
    %2045 = vmatpush1.msra.mxu0 0.0
    %2046 = vmatprep.subr.mxu0 0.0
    %2047 = vmatpush1.msra.mxu0 0.0
    %2048 = vmatprep.subr.mxu0 0.0
    %2049 = vmatpush1.msra.mxu0 0.0
    %2050 = vmatprep.subr.mxu0 0.0
    %2051 = vmatpush1.msra.mxu0 0.0
    %2052 = vmatprep.subr.mxu0 0.0
    %2053 = vmatpush1.msra.mxu0 0.0
    %2054 = vmatprep.subr.mxu0 0.0
    %2055 = vmatpush1.msra.mxu0 0.0
    %2056 = vmatprep.mubr.f32.mxu0 0.0
    %2057 = vmatmul.mubr.f32.gmra.mrb[0].mxu0 %v1990
    %v2058 = vpop.f32.mrb[0].mxu0
    %v2059 = vadd.f32 %v1984, %v2058
    %v2060 = vpop.f32.mrb[0].mxu0
    %2061 = vdwg.mxu0
    %v2062 = vadd.f32 %v2059, %v196
    %v2063 = vxor.u32 %v2062, 2147483648
    %v2064 = vmul.f32 %v2063, 1.442695
    %v2065 = vpow.pop %v2064
    %v2066 = vadd.f32 %v2065, 1.0
    %v2067 = vrcp.pop %v2066
    %v2068 = vmul.f32 1.0, %v2067
    %v2069 = vtanh.pop %v2062
    %v2070 = vmul.f32 %v2068, %v1810
    %2072 = vrot.lane.b32.xlu0 %v2069, 64
    %v2073 = vpop.permute.xlu0 %2072
    %v2075 = vmul.f32 %v2068, %v2073
    %2077 = vrot.lane.b32.xlu0 %v2075, 32
    %v2078 = vpop.permute.xlu0 %2077
    %v2080 = vadd.f32 %v2070, %v2078
    %v2081 = vtanh.pop %v2080
    %2083 = vrot.lane.b32.xlu0 %v2081, 64
    %v2084 = vpop.permute.xlu0 %2083
    %v2086 = vmul.f32 %v2068, %v2084
    %2087 = vmatprep.subr.mxu0 0.0
    %2088 = vmatpush1.msra.mxu0 %v179
    %2089 = vmatprep.subr.mxu0 0.0
    %2090 = vmatpush1.msra.mxu0 %v180
    %2091 = vmatprep.subr.mxu0 0.0
    %2092 = vmatpush1.msra.mxu0 %v181
    %2093 = vmatprep.subr.mxu0 0.0
    %2094 = vmatpush1.msra.mxu0 %v182
    %2095 = vmatprep.subr.mxu0 0.0
    %2096 = vmatpush1.msra.mxu0 0.0
    %2097 = vmatprep.subr.mxu0 0.0
    %2098 = vmatpush1.msra.mxu0 0.0
    %2099 = vmatprep.subr.mxu0 0.0
    %2100 = vmatpush1.msra.mxu0 0.0
    %2101 = vmatprep.subr.mxu0 0.0
    %2102 = vmatpush1.msra.mxu0 0.0
    %2103 = vmatprep.subr.mxu0 0.0
    %2104 = vmatpush1.msra.mxu0 0.0
    %2105 = vmatprep.subr.mxu0 0.0
    %2106 = vmatpush1.msra.mxu0 0.0
    %2107 = vmatprep.subr.mxu0 0.0
    %2108 = vmatpush1.msra.mxu0 0.0
    %2109 = vmatprep.subr.mxu0 0.0
    %2110 = vmatpush1.msra.mxu0 0.0
    %2111 = vmatprep.subr.mxu0 0.0
    %2112 = vmatpush1.msra.mxu0 0.0
    %2113 = vmatprep.subr.mxu0 0.0
    %2114 = vmatpush1.msra.mxu0 0.0
    %2115 = vmatprep.subr.mxu0 0.0
    %2116 = vmatpush1.msra.mxu0 0.0
    %2117 = vmatprep.subr.mxu0 0.0
    %2118 = vmatpush1.msra.mxu0 0.0
    %2119 = vmatprep.subr.mxu0 0.0
    %2120 = vmatpush1.msra.mxu0 0.0
    %2121 = vmatprep.subr.mxu0 0.0
    %2122 = vmatpush1.msra.mxu0 0.0
    %2123 = vmatprep.subr.mxu0 0.0
    %2124 = vmatpush1.msra.mxu0 0.0
    %2125 = vmatprep.subr.mxu0 0.0
    %2126 = vmatpush1.msra.mxu0 0.0
    %2127 = vmatprep.subr.mxu0 0.0
    %2128 = vmatpush1.msra.mxu0 0.0
    %2129 = vmatprep.subr.mxu0 0.0
    %2130 = vmatpush1.msra.mxu0 0.0
    %2131 = vmatprep.subr.mxu0 0.0
    %2132 = vmatpush1.msra.mxu0 0.0
    %2133 = vmatprep.subr.mxu0 0.0
    %2134 = vmatpush1.msra.mxu0 0.0
    %2135 = vmatprep.subr.mxu0 0.0
    %2136 = vmatpush1.msra.mxu0 0.0
    %2137 = vmatprep.subr.mxu0 0.0
    %2138 = vmatpush1.msra.mxu0 0.0
    %2139 = vmatprep.subr.mxu0 0.0
    %2140 = vmatpush1.msra.mxu0 0.0
    %2141 = vmatprep.subr.mxu0 0.0
    %2142 = vmatpush1.msra.mxu0 0.0
    %2143 = vmatprep.subr.mxu0 0.0
    %2144 = vmatpush1.msra.mxu0 0.0
    %2145 = vmatprep.subr.mxu0 0.0
    %2146 = vmatpush1.msra.mxu0 0.0
    %2147 = vmatprep.subr.mxu0 0.0
    %2148 = vmatpush1.msra.mxu0 0.0
    %2149 = vmatprep.subr.mxu0 0.0
    %2150 = vmatpush1.msra.mxu0 0.0
    %2151 = vmatprep.mubr.f32.mxu0 0.0
    %2152 = vmatmul.mubr.f32.gmra.mrb[0].mxu0 %v1990
    %v2153 = vpop.f32.mrb[0].mxu0
    %v2154 = vadd.f32 0.0, %v2153
    %v2155 = vpop.f32.mrb[0].mxu0
    %2156 = vdwg.mxu0
    %v2157 = vadd.f32 %v176, %v2154
    %v2158 = vxor.u32 %v2157, 2147483648
    %v2159 = vmul.f32 %v2158, 1.442695
    %v2160 = vpow.pop %v2159
    %v2161 = vadd.f32 %v2160, 1.0
    %v2162 = vrcp.pop %v2161
    %v2163 = vmul.f32 1.0, %v2162
    %v2164 = vtanh.pop %v2157
    %v2165 = vmul.f32 %v2163, %v1905
    %2167 = vrot.lane.b32.xlu0 %v2164, 64
    %v2168 = vpop.permute.xlu0 %2167
    %v2170 = vmul.f32 %v2163, %v2168
    %2172 = vrot.lane.b32.xlu0 %v2170, 32
    %v2173 = vpop.permute.xlu0 %2172
    %v2175 = vadd.f32 %v2165, %v2173
    %v2176 = vtanh.pop %v2175
    %2178 = vrot.lane.b32.xlu0 %v2176, 64
    %v2179 = vpop.permute.xlu0 %2178
    %v2181 = vmul.f32 %v2163, %v2179
    %2183 = vrot.lane.b32.xlu0 %v2086, 32
    %v2184 = vpop.permute.xlu0 %2183
    %v2185 = vsel %vm198, %v2184, 0
    %2187 = vmatprep.subr.mxu0 0.0
    %2188 = vmatpush1.msra.mxu0 %v187
    %2189 = vmatprep.subr.mxu0 0.0
    %2190 = vmatpush1.msra.mxu0 %v188
    %2191 = vmatprep.subr.mxu0 0.0
    %2192 = vmatpush1.msra.mxu0 %v189
    %2193 = vmatprep.subr.mxu0 0.0
    %2194 = vmatpush1.msra.mxu0 %v190
    %2195 = vmatprep.subr.mxu0 0.0
    %2196 = vmatpush1.msra.mxu0 0.0
    %2197 = vmatprep.subr.mxu0 0.0
    %2198 = vmatpush1.msra.mxu0 0.0
    %2199 = vmatprep.subr.mxu0 0.0
    %2200 = vmatpush1.msra.mxu0 0.0
    %2201 = vmatprep.subr.mxu0 0.0
    %2202 = vmatpush1.msra.mxu0 0.0
    %2203 = vmatprep.subr.mxu0 0.0
    %2204 = vmatpush1.msra.mxu0 0.0
    %2205 = vmatprep.subr.mxu0 0.0
    %2206 = vmatpush1.msra.mxu0 0.0
    %2207 = vmatprep.subr.mxu0 0.0
    %2208 = vmatpush1.msra.mxu0 0.0
    %2209 = vmatprep.subr.mxu0 0.0
    %2210 = vmatpush1.msra.mxu0 0.0
    %2211 = vmatprep.subr.mxu0 0.0
    %2212 = vmatpush1.msra.mxu0 0.0
    %2213 = vmatprep.subr.mxu0 0.0
    %2214 = vmatpush1.msra.mxu0 0.0
    %2215 = vmatprep.subr.mxu0 0.0
    %2216 = vmatpush1.msra.mxu0 0.0
    %2217 = vmatprep.subr.mxu0 0.0
    %2218 = vmatpush1.msra.mxu0 0.0
    %2219 = vmatprep.subr.mxu0 0.0
    %2220 = vmatpush1.msra.mxu0 0.0
    %2221 = vmatprep.subr.mxu0 0.0
    %2222 = vmatpush1.msra.mxu0 0.0
    %2223 = vmatprep.subr.mxu0 0.0
    %2224 = vmatpush1.msra.mxu0 0.0
    %2225 = vmatprep.subr.mxu0 0.0
    %2226 = vmatpush1.msra.mxu0 0.0
    %2227 = vmatprep.subr.mxu0 0.0
    %2228 = vmatpush1.msra.mxu0 0.0
    %2229 = vmatprep.subr.mxu0 0.0
    %2230 = vmatpush1.msra.mxu0 0.0
    %2231 = vmatprep.subr.mxu0 0.0
    %2232 = vmatpush1.msra.mxu0 0.0
    %2233 = vmatprep.subr.mxu0 0.0
    %2234 = vmatpush1.msra.mxu0 0.0
    %2235 = vmatprep.subr.mxu0 0.0
    %2236 = vmatpush1.msra.mxu0 0.0
    %2237 = vmatprep.subr.mxu0 0.0
    %2238 = vmatpush1.msra.mxu0 0.0
    %2239 = vmatprep.subr.mxu0 0.0
    %2240 = vmatpush1.msra.mxu0 0.0
    %2241 = vmatprep.subr.mxu0 0.0
    %2242 = vmatpush1.msra.mxu0 0.0
    %2243 = vmatprep.subr.mxu0 0.0
    %2244 = vmatpush1.msra.mxu0 0.0
    %2245 = vmatprep.subr.mxu0 0.0
    %2246 = vmatpush1.msra.mxu0 0.0
    %2247 = vmatprep.subr.mxu0 0.0
    %2248 = vmatpush1.msra.mxu0 0.0
    %2249 = vmatprep.subr.mxu0 0.0
    %2250 = vmatpush1.msra.mxu0 0.0
    %2251 = vmatprep.mubr.f32.mxu0 0.0
    %2252 = vmatmul.mubr.f32.gmra.mrb[0].mxu0 %v2185
    %v2253 = vpop.f32.mrb[0].mxu0
    %v2254 = vadd.f32 0.0, %v2253
    %v2255 = vpop.f32.mrb[0].mxu0
    %2256 = vdwg.mxu0
    %2258 = vrot.lane.b32.xlu0 %v2181, 32
    %v2259 = vpop.permute.xlu0 %2258
    %v2260 = vsel %vm198, %v2259, 0
    %2262 = vmatprep.subr.mxu0 0.0
    %2263 = vmatpush1.msra.mxu0 %v183
    %2264 = vmatprep.subr.mxu0 0.0
    %2265 = vmatpush1.msra.mxu0 %v184
    %2266 = vmatprep.subr.mxu0 0.0
    %2267 = vmatpush1.msra.mxu0 %v185
    %2268 = vmatprep.subr.mxu0 0.0
    %2269 = vmatpush1.msra.mxu0 %v186
    %2270 = vmatprep.subr.mxu0 0.0
    %2271 = vmatpush1.msra.mxu0 0.0
    %2272 = vmatprep.subr.mxu0 0.0
    %2273 = vmatpush1.msra.mxu0 0.0
    %2274 = vmatprep.subr.mxu0 0.0
    %2275 = vmatpush1.msra.mxu0 0.0
    %2276 = vmatprep.subr.mxu0 0.0
    %2277 = vmatpush1.msra.mxu0 0.0
    %2278 = vmatprep.subr.mxu0 0.0
    %2279 = vmatpush1.msra.mxu0 0.0
    %2280 = vmatprep.subr.mxu0 0.0
    %2281 = vmatpush1.msra.mxu0 0.0
    %2282 = vmatprep.subr.mxu0 0.0
    %2283 = vmatpush1.msra.mxu0 0.0
    %2284 = vmatprep.subr.mxu0 0.0
    %2285 = vmatpush1.msra.mxu0 0.0
    %2286 = vmatprep.subr.mxu0 0.0
    %2287 = vmatpush1.msra.mxu0 0.0
    %2288 = vmatprep.subr.mxu0 0.0
    %2289 = vmatpush1.msra.mxu0 0.0
    %2290 = vmatprep.subr.mxu0 0.0
    %2291 = vmatpush1.msra.mxu0 0.0
    %2292 = vmatprep.subr.mxu0 0.0
    %2293 = vmatpush1.msra.mxu0 0.0
    %2294 = vmatprep.subr.mxu0 0.0
    %2295 = vmatpush1.msra.mxu0 0.0
    %2296 = vmatprep.subr.mxu0 0.0
    %2297 = vmatpush1.msra.mxu0 0.0
    %2298 = vmatprep.subr.mxu0 0.0
    %2299 = vmatpush1.msra.mxu0 0.0
    %2300 = vmatprep.subr.mxu0 0.0
    %2301 = vmatpush1.msra.mxu0 0.0
    %2302 = vmatprep.subr.mxu0 0.0
    %2303 = vmatpush1.msra.mxu0 0.0
    %2304 = vmatprep.subr.mxu0 0.0
    %2305 = vmatpush1.msra.mxu0 0.0
    %2306 = vmatprep.subr.mxu0 0.0
    %2307 = vmatpush1.msra.mxu0 0.0
    %2308 = vmatprep.subr.mxu0 0.0
    %2309 = vmatpush1.msra.mxu0 0.0
    %2310 = vmatprep.subr.mxu0 0.0
    %2311 = vmatpush1.msra.mxu0 0.0
    %2312 = vmatprep.subr.mxu0 0.0
    %2313 = vmatpush1.msra.mxu0 0.0
    %2314 = vmatprep.subr.mxu0 0.0
    %2315 = vmatpush1.msra.mxu0 0.0
    %2316 = vmatprep.subr.mxu0 0.0
    %2317 = vmatpush1.msra.mxu0 0.0
    %2318 = vmatprep.subr.mxu0 0.0
    %2319 = vmatpush1.msra.mxu0 0.0
    %2320 = vmatprep.subr.mxu0 0.0
    %2321 = vmatpush1.msra.mxu0 0.0
    %2322 = vmatprep.subr.mxu0 0.0
    %2323 = vmatpush1.msra.mxu0 0.0
    %2324 = vmatprep.subr.mxu0 0.0
    %2325 = vmatpush1.msra.mxu0 0.0
    %2326 = vmatprep.mubr.f32.mxu0 0.0
    %2327 = vmatmul.mubr.f32.gmra.mrb[0].mxu0 %v2260
    %v2328 = vpop.f32.mrb[0].mxu0
    %v2329 = vadd.f32 %v2254, %v2328
    %v2330 = vpop.f32.mrb[0].mxu0
    %2331 = vdwg.mxu0
    %v2332 = vadd.f32 %v2329, %v196
    %v2333 = vxor.u32 %v2332, 2147483648
    %v2334 = vmul.f32 %v2333, 1.442695
    %v2335 = vpow.pop %v2334
    %v2336 = vadd.f32 %v2335, 1.0
    %v2337 = vrcp.pop %v2336
    %v2338 = vmul.f32 1.0, %v2337
    %v2339 = vtanh.pop %v2332
    %v2340 = vmul.f32 %v2338, %v2080
    %2342 = vrot.lane.b32.xlu0 %v2339, 64
    %v2343 = vpop.permute.xlu0 %2342
    %v2345 = vmul.f32 %v2338, %v2343
    %2347 = vrot.lane.b32.xlu0 %v2345, 32
    %v2348 = vpop.permute.xlu0 %2347
    %v2350 = vadd.f32 %v2340, %v2348
    %v2351 = vtanh.pop %v2350
    %2353 = vrot.lane.b32.xlu0 %v2351, 64
    %v2354 = vpop.permute.xlu0 %2353
    %v2356 = vmul.f32 %v2338, %v2354
    %v2357 = vld [vmem:[%s7] sm:$0xff]
    %v2358 = vld [vmem:[%s7 + $0x8] sm:$0xff]
    %v2359 = vld [vmem:[%s7 + $0x10] sm:$0xff]
    %v2360 = vld [vmem:[%s7 + $0x18] sm:$0xff]
    %v2361 = vld [vmem:[%s8] sm:$0x1]
    %v2363 = vlaneseq
    %v2364 = vshrl.u32 %v2363, 7
    %v2365 = vsub.s32 0, %v2364
    %v2366 = vrot.slane %v2361, %v2365
    %2369 = vrot.lane.b32.xlu0 %v2356, 32
    %v2370 = vpop.permute.xlu0 %2369
    %v2371 = vsel %vm198, %v2370, 0
    %2373 = vmatprep.subr.mxu0 0.0
    %2374 = vmatpush1.msra.mxu0 %v2357
    %2375 = vmatprep.subr.mxu0 0.0
    %2376 = vmatpush1.msra.mxu0 %v2358
    %2377 = vmatprep.subr.mxu0 0.0
    %2378 = vmatpush1.msra.mxu0 %v2359
    %2379 = vmatprep.subr.mxu0 0.0
    %2380 = vmatpush1.msra.mxu0 %v2360
    %2381 = vmatprep.subr.mxu0 0.0
    %2382 = vmatpush1.msra.mxu0 0.0
    %2383 = vmatprep.subr.mxu0 0.0
    %2384 = vmatpush1.msra.mxu0 0.0
    %2385 = vmatprep.subr.mxu0 0.0
    %2386 = vmatpush1.msra.mxu0 0.0
    %2387 = vmatprep.subr.mxu0 0.0
    %2388 = vmatpush1.msra.mxu0 0.0
    %2389 = vmatprep.subr.mxu0 0.0
    %2390 = vmatpush1.msra.mxu0 0.0
    %2391 = vmatprep.subr.mxu0 0.0
    %2392 = vmatpush1.msra.mxu0 0.0
    %2393 = vmatprep.subr.mxu0 0.0
    %2394 = vmatpush1.msra.mxu0 0.0
    %2395 = vmatprep.subr.mxu0 0.0
    %2396 = vmatpush1.msra.mxu0 0.0
    %2397 = vmatprep.subr.mxu0 0.0
    %2398 = vmatpush1.msra.mxu0 0.0
    %2399 = vmatprep.subr.mxu0 0.0
    %2400 = vmatpush1.msra.mxu0 0.0
    %2401 = vmatprep.subr.mxu0 0.0
    %2402 = vmatpush1.msra.mxu0 0.0
    %2403 = vmatprep.subr.mxu0 0.0
    %2404 = vmatpush1.msra.mxu0 0.0
    %2405 = vmatprep.subr.mxu0 0.0
    %2406 = vmatpush1.msra.mxu0 0.0
    %2407 = vmatprep.subr.mxu0 0.0
    %2408 = vmatpush1.msra.mxu0 0.0
    %2409 = vmatprep.subr.mxu0 0.0
    %2410 = vmatpush1.msra.mxu0 0.0
    %2411 = vmatprep.subr.mxu0 0.0
    %2412 = vmatpush1.msra.mxu0 0.0
    %2413 = vmatprep.subr.mxu0 0.0
    %2414 = vmatpush1.msra.mxu0 0.0
    %2415 = vmatprep.subr.mxu0 0.0
    %2416 = vmatpush1.msra.mxu0 0.0
    %2417 = vmatprep.subr.mxu0 0.0
    %2418 = vmatpush1.msra.mxu0 0.0
    %2419 = vmatprep.subr.mxu0 0.0
    %2420 = vmatpush1.msra.mxu0 0.0
    %2421 = vmatprep.subr.mxu0 0.0
    %2422 = vmatpush1.msra.mxu0 0.0
    %2423 = vmatprep.subr.mxu0 0.0
    %2424 = vmatpush1.msra.mxu0 0.0
    %2425 = vmatprep.subr.mxu0 0.0
    %2426 = vmatpush1.msra.mxu0 0.0
    %2427 = vmatprep.subr.mxu0 0.0
    %2428 = vmatpush1.msra.mxu0 0.0
    %2429 = vmatprep.subr.mxu0 0.0
    %2430 = vmatpush1.msra.mxu0 0.0
    %2431 = vmatprep.subr.mxu0 0.0
    %2432 = vmatpush1.msra.mxu0 0.0
    %2433 = vmatprep.subr.mxu0 0.0
    %2434 = vmatpush1.msra.mxu0 0.0
    %2435 = vmatprep.subr.mxu0 0.0
    %2436 = vmatpush1.msra.mxu0 0.0
    %2437 = vmatprep.mubr.f32.mxu0 0.0
    %2438 = vmatmul.mubr.f32.gmra.mrb[0].mxu0 %v2371
    %v2439 = vpop.f32.mrb[0].mxu0
    %v2440 = vadd.f32 %v2366, %v2439
    %v2441 = vpop.f32.mrb[0].mxu0
    %2442 = vdwg.mxu0
    %vm2443 = vcmask 130048
    %2444 = vst.msk [vmem:[#allocation2] sm:$0xff] %vm2443, %v2440
    // Predicated region
    $region38: #{tpu_custom_call.1} parent=1 // pred_check
      _
    $region39: #{tpu_custom_call.1} parent=1 // pred_check_branch
      %2446 = sbr.rel (0) target = $region41
    $region40: #{tpu_custom_call.1} parent=1 // pred_region
      %s2448 = ssub.s32 128, 128
      %2449 = vsyncadd [#allocation3], %s2448
      %s2451 = sshll.u32 [#allocation2], 4
      %s2452 = int_to_ptr.vmem [resolvable:$true] %s2451
      %2454 = dma.vmem_to_hbm [thread:$0]  %s2452, 128, %s9, [#allocation3]
    $region41: #{tpu_custom_call.1} parent=1 // pred_fallthru
      _
    // Predicated region
    $region42: #{tpu_custom_call.1} parent=1 // pred_check
      _
    $region43: #{tpu_custom_call.1} parent=1 // pred_check_branch
      %2456 = sbr.rel (0) target = $region45
    $region44: #{tpu_custom_call.1} parent=1 // pred_region
      %2457 = dma.done [#allocation3], 128
    $region45: #{tpu_custom_call.1} parent=1 // pred_fallthru
      _
    %2458 = vsyncpa [#allocation3], 1

</llo_original>
